<compile_context>
chip_gen: v7x
topology: tpu7x:2x2x1
jax: 0.10.0
libtpu: 0.0.40
codegen_flags: <defaults>
</compile_context>

<pallas_src>
import functools

import jax
import jax.numpy as jnp
from jax.experimental import pallas as pl
from jax.experimental.pallas import tpu as pltpu


def _round_up(n, m):
    return ((n + m - 1) // m) * m


def _leaky_relu(x, slope=0.01):
    return jnp.where(x >= 0, x, slope * x)


def _batchnorm(x, gamma, beta, eps=1e-5):
    # Training-mode BatchNorm1d: stats over the batch axis, biased variance,
    # rewritten as a single scale/shift per element.
    mean = jnp.mean(x, axis=0, keepdims=True)
    d = x - mean
    var = jnp.mean(d * d, axis=0, keepdims=True)
    inv = jax.lax.rsqrt(var + eps)
    scale = gamma * inv
    shift = beta - mean * scale
    return x * scale + shift


def _generator_kernel(dims, z_ref, w1_ref, p_ref, w2_hbm, w3_hbm, w4_hbm,
                      out_ref, w2_vmem, w3_vmem, w4_vmem, sem):
    d1, d2, d3, d4, ks = dims          # padded widths of blocks 1..4, w3 K-split
    chunk3 = ks < d2

    # Issue every large-weight DMA at kernel entry (consumption order) so the
    # DMA engine is busy while blocks 1-2 compute.
    cp2 = pltpu.make_async_copy(w2_hbm, w2_vmem, sem.at[0])
    cp3a = pltpu.make_async_copy(w3_hbm.at[0:ks, :], w3_vmem.at[0:ks, :], sem.at[1])
    cp2.start()
    cp3a.start()
    if chunk3:
        cp3b = pltpu.make_async_copy(w3_hbm.at[ks:d2, :], w3_vmem.at[ks:d2, :],
                                     sem.at[2])
        cp3b.start()
    cp4 = pltpu.make_async_copy(w4_hbm, w4_vmem, sem.at[3])
    cp4.start()

    z = z_ref[...].astype(jnp.bfloat16)

    # Block 1: Linear -> LeakyReLU -> BatchNorm1d(256)
    h = jnp.dot(z, w1_ref[...], preferred_element_type=jnp.float32) + p_ref[0:1, 0:d1]
    h = _leaky_relu(h)
    h = _batchnorm(h, p_ref[1:2, 0:d1], p_ref[2:3, 0:d1])

    # Block 2: Linear -> LeakyReLU -> BatchNorm1d(fc_units)
    cp2.wait()
    h = jnp.dot(h.astype(jnp.bfloat16), w2_vmem[...],
                preferred_element_type=jnp.float32) + p_ref[3:4, 0:d2]
    h = _leaky_relu(h)
    h = _batchnorm(h, p_ref[4:5, 0:d2], p_ref[5:6, 0:d2])

    # Block 3: Linear -> LeakyReLU -> BatchNorm1d(2*fc_units)
    # K-chunked: start the matmul as soon as the first half of w3 has landed.
    hb = h.astype(jnp.bfloat16)
    cp3a.wait()
    acc = jnp.dot(hb[:, 0:ks], w3_vmem[0:ks, :], preferred_element_type=jnp.float32)
    if chunk3:
        cp3b.wait()
        acc = acc + jnp.dot(hb[:, ks:d2], w3_vmem[ks:d2, :],
                            preferred_element_type=jnp.float32)
    h = acc + p_ref[6:7, 0:d3]
    h = _leaky_relu(h)
    h = _batchnorm(h, p_ref[7:8, 0:d3], p_ref[8:9, 0:d3])

    # Output projection (lane-dense, padded to 128)
    cp4.wait()
    out = jnp.dot(h.astype(jnp.bfloat16), w4_vmem[...],
                  preferred_element_type=jnp.float32) + p_ref[9:10, 0:d4]
    out_ref[...] = out.astype(out_ref.dtype)


def _pad2(x, rows, cols):
    r, c = x.shape
    return jnp.pad(x, ((0, rows - r), (0, cols - c)))


def prepare_generator_params(params):
    """One-time preparation (call once per weight update, NOT per forward):
    zero-pad all widths to multiples of 128, cast weights to bf16, and pack the
    ten bias/gamma/beta vectors into a single f32 slab."""
    z_size = params["w1"].shape[0]
    d1 = params["w1"].shape[1]           # 256
    d2 = params["w2"].shape[1]           # fc_units
    d3 = params["w3"].shape[1]           # 2 * fc_units
    d4 = params["w4"].shape[1]           # input_feat

    kp = _round_up(z_size, 128)
    d1p = _round_up(d1, 128)
    d2p = _round_up(d2, 128)
    d3p = _round_up(d3, 128)
    d4p = _round_up(d4, 128)
    dmax = max(d1p, d2p, d3p, d4p)

    w1 = _pad2(params["w1"], kp, d1p).astype(jnp.bfloat16)
    w2 = _pad2(params["w2"], d1p, d2p).astype(jnp.bfloat16)
    w3 = _pad2(params["w3"], d2p, d3p).astype(jnp.bfloat16)
    w4 = _pad2(params["w4"], d3p, d4p).astype(jnp.bfloat16)

    def row(x):
        return _pad2(jnp.asarray(x, jnp.float32).reshape(1, -1), 1, dmax)

    # Rows: b1,g1,be1, b2,g2,be2, b3,g3,be3, b4, + zero padding to 16 rows.
    slab = jnp.concatenate([
        row(params["b1"]), row(params["g1"]), row(params["be1"]),
        row(params["b2"]), row(params["g2"]), row(params["be2"]),
        row(params["b3"]), row(params["g3"]), row(params["be3"]),
        row(params["b4"]),
        jnp.zeros((6, dmax), jnp.float32),
    ], axis=0)

    # Static K-split for the chunked w3 DMA (multiple of 128; no chunking if tiny).
    ks = _round_up(d2p // 2, 128) if d2p >= 256 else d2p

    meta = dict(z_size=z_size, input_feat=d4,
                kp=kp, d1=d1p, d2=d2p, d3=d3p, d4=d4p, ks=ks)
    tensors = dict(w1=w1, w2=w2, w3=w3, w4=w4, slab=slab)
    return {"tensors": tensors, "meta": meta}


def generator_forward(z, prepared):
    """z: (B, z_size) f32. prepared: output of prepare_generator_params."""
    meta = prepared["meta"]
    t = prepared["tensors"]
    B = z.shape[0]
    dims = (meta["d1"], meta["d2"], meta["d3"], meta["d4"], meta["ks"])

    # Per-call work kept minimal: pad z to lane-dense K, run kernel, slice output.
    z_pad = jnp.pad(z, ((0, 0), (0, meta["kp"] - z.shape[1])))

    vmem = pl.BlockSpec(memory_space=pltpu.MemorySpace.VMEM)
    hbm = pl.BlockSpec(memory_space=pl.ANY)

    out_padded = pl.pallas_call(
        functools.partial(_generator_kernel, dims),
        out_shape=jax.ShapeDtypeStruct((B, meta["d4"]), jnp.float32),
        in_specs=[vmem, vmem, vmem, hbm, hbm, hbm],
        out_specs=vmem,
        scratch_shapes=[
            pltpu.VMEM((meta["d1"], meta["d2"]), jnp.bfloat16),   # w2 landing buffer
            pltpu.VMEM((meta["d2"], meta["d3"]), jnp.bfloat16),   # w3 landing buffer
            pltpu.VMEM((meta["d3"], meta["d4"]), jnp.bfloat16),   # w4 landing buffer
            pltpu.SemaphoreType.DMA((4,)),
        ],
        compiler_params=pltpu.CompilerParams(vmem_limit_bytes=16 << 20),
    )(z_pad, t["w1"], t["slab"], t["w2"], t["w3"], t["w4"])

    return out_padded[:, :meta["input_feat"]]


def make_params(key, z_size, input_feat, fc_units=400):
    dims = [z_size, 256, fc_units, 2 * fc_units, input_feat]
    params = {}
    keys = jax.random.split(key, 8)
    for i in range(4):
        d_in, d_out = dims[i], dims[i + 1]
        bound = 1.0 / float(d_in) ** 0.5
        params[f"w{i+1}"] = jax.random.uniform(
            keys[2 * i], (d_in, d_out), jnp.float32, -bound, bound)
        params[f"b{i+1}"] = jax.random.uniform(
            keys[2 * i + 1], (1, d_out), jnp.float32, -bound, bound)
    # BatchNorm affine params (PyTorch default init: gamma=1, beta=0).
    for i, d in enumerate(dims[1:4], start=1):
        params[f"g{i}"] = jnp.ones((1, d), jnp.float32)
        params[f"be{i}"] = jnp.zeros((1, d), jnp.float32)
    return params


def reference_forward(z, params):
    """Pure-JAX reference mirroring the kernel's numerics
    (bf16 weights/activations into each matmul, f32 accumulation, f32 BN)."""
    h = z
    for i in range(1, 4):
        w = params[f"w{i}"].astype(jnp.bfloat16)
        h = jnp.dot(h.astype(jnp.bfloat16), w,
                    preferred_element_type=jnp.float32) + params[f"b{i}"]
        h = _leaky_relu(h)
        h = _batchnorm(h, params[f"g{i}"], params[f"be{i}"])
    w4 = params["w4"].astype(jnp.bfloat16)
    return jnp.dot(h.astype(jnp.bfloat16), w4,
                   preferred_element_type=jnp.float32) + params["b4"]


if __name__ == "__main__":
    z_size = 32
    input_feat = 12
    fc_units = 400
    batch = 8

    key = jax.random.PRNGKey(0)
    k_z, k_p = jax.random.split(key)
    z = jax.random.normal(k_z, (batch, z_size), jnp.float32)
    params = make_params(k_p, z_size, input_feat, fc_units)

    prepared = prepare_generator_params(params)      # one-time weight prep
    out = generator_forward(z, prepared)
    out = jax.block_until_ready(out)

    ref = reference_forward(z, params)
    assert out.shape == (batch, input_feat)
    max_err = float(jnp.max(jnp.abs(out - ref)))
    assert jnp.allclose(out, ref, atol=2e-2, rtol=2e-2), f"mismatch vs reference: {max_err}"

    print("KERNEL_OK")
</pallas_src>

<mosaic_0001>
module attributes {stable_mosaic.version = 11 : i64} {
  func.func @_generator_kernel(%arg0: memref<8x128xf32, #tpu.memory_space<vmem>>, %arg1: memref<128x256xbf16, #tpu.memory_space<vmem>>, %arg2: memref<16x896xf32, #tpu.memory_space<vmem>>, %arg3: memref<256x512xbf16, #tpu.memory_space<any>>, %arg4: memref<512x896xbf16, #tpu.memory_space<any>>, %arg5: memref<896x128xbf16, #tpu.memory_space<any>>, %arg6: memref<8x128xf32, #tpu.memory_space<vmem>>, %arg7: memref<256x512xbf16, #tpu.memory_space<vmem>>, %arg8: memref<512x896xbf16, #tpu.memory_space<vmem>>, %arg9: memref<896x128xbf16, #tpu.memory_space<vmem>>, %arg10: memref<4x!tpu.dma_semaphore, #tpu.memory_space<semaphore_mem>>) attributes {dimension_semantics = [], scalar_prefetch = 0 : i64, scratch_operands = 4 : i64, tpu.core_type = #tpu.core_type<tc>} {
    %c0_i32 = arith.constant 0 : i32
    %0 = tpu.memref_slice %arg10[%c0_i32] : memref<4x!tpu.dma_semaphore, #tpu.memory_space<semaphore_mem>> -> memref<1x!tpu.dma_semaphore, #tpu.memory_space<semaphore_mem>>
    %1 = tpu.memref_squeeze %0 : memref<1x!tpu.dma_semaphore, #tpu.memory_space<semaphore_mem>> -> memref<!tpu.dma_semaphore, #tpu.memory_space<semaphore_mem>>
    tpu.enqueue_dma source(%arg3 : memref<256x512xbf16, #tpu.memory_space<any>>) target(%arg7 : memref<256x512xbf16, #tpu.memory_space<vmem>>) target_semaphore(%1 : memref<!tpu.dma_semaphore, #tpu.memory_space<semaphore_mem>>)
    %c1_i32 = arith.constant 1 : i32
    %c0_i32_0 = arith.constant 0 : i32
    %c0_i32_1 = arith.constant 0 : i32
    %2 = tpu.memref_slice %arg4[%c0_i32_0, %c0_i32_1] : memref<512x896xbf16, #tpu.memory_space<any>> -> memref<256x896xbf16, #tpu.memory_space<any>>
    %c0_i32_2 = arith.constant 0 : i32
    %c0_i32_3 = arith.constant 0 : i32
    %3 = tpu.memref_slice %arg8[%c0_i32_2, %c0_i32_3] : memref<512x896xbf16, #tpu.memory_space<vmem>> -> memref<256x896xbf16, #tpu.memory_space<vmem>>
    %4 = tpu.memref_slice %arg10[%c1_i32] : memref<4x!tpu.dma_semaphore, #tpu.memory_space<semaphore_mem>> -> memref<1x!tpu.dma_semaphore, #tpu.memory_space<semaphore_mem>>
    %5 = tpu.memref_squeeze %4 : memref<1x!tpu.dma_semaphore, #tpu.memory_space<semaphore_mem>> -> memref<!tpu.dma_semaphore, #tpu.memory_space<semaphore_mem>>
    tpu.enqueue_dma source(%2 : memref<256x896xbf16, #tpu.memory_space<any>>) target(%3 : memref<256x896xbf16, #tpu.memory_space<vmem>>) target_semaphore(%5 : memref<!tpu.dma_semaphore, #tpu.memory_space<semaphore_mem>>)
    %c2_i32 = arith.constant 2 : i32
    %c256_i32 = arith.constant 256 : i32
    %c0_i32_4 = arith.constant 0 : i32
    %6 = tpu.memref_slice %arg4[%c256_i32, %c0_i32_4] : memref<512x896xbf16, #tpu.memory_space<any>> -> memref<256x896xbf16, #tpu.memory_space<any>>
    %c256_i32_5 = arith.constant 256 : i32
    %c0_i32_6 = arith.constant 0 : i32
    %7 = tpu.memref_slice %arg8[%c256_i32_5, %c0_i32_6] : memref<512x896xbf16, #tpu.memory_space<vmem>> -> memref<256x896xbf16, #tpu.memory_space<vmem>>
    %8 = tpu.memref_slice %arg10[%c2_i32] : memref<4x!tpu.dma_semaphore, #tpu.memory_space<semaphore_mem>> -> memref<1x!tpu.dma_semaphore, #tpu.memory_space<semaphore_mem>>
    %9 = tpu.memref_squeeze %8 : memref<1x!tpu.dma_semaphore, #tpu.memory_space<semaphore_mem>> -> memref<!tpu.dma_semaphore, #tpu.memory_space<semaphore_mem>>
    tpu.enqueue_dma source(%6 : memref<256x896xbf16, #tpu.memory_space<any>>) target(%7 : memref<256x896xbf16, #tpu.memory_space<vmem>>) target_semaphore(%9 : memref<!tpu.dma_semaphore, #tpu.memory_space<semaphore_mem>>)
    %c3_i32 = arith.constant 3 : i32
    %10 = tpu.memref_slice %arg10[%c3_i32] : memref<4x!tpu.dma_semaphore, #tpu.memory_space<semaphore_mem>> -> memref<1x!tpu.dma_semaphore, #tpu.memory_space<semaphore_mem>>
    %11 = tpu.memref_squeeze %10 : memref<1x!tpu.dma_semaphore, #tpu.memory_space<semaphore_mem>> -> memref<!tpu.dma_semaphore, #tpu.memory_space<semaphore_mem>>
    tpu.enqueue_dma source(%arg5 : memref<896x128xbf16, #tpu.memory_space<any>>) target(%arg9 : memref<896x128xbf16, #tpu.memory_space<vmem>>) target_semaphore(%11 : memref<!tpu.dma_semaphore, #tpu.memory_space<semaphore_mem>>)
    %c0 = arith.constant 0 : index
    %c0_7 = arith.constant 0 : index
    %12 = vector.load %arg0[%c0, %c0_7] : memref<8x128xf32, #tpu.memory_space<vmem>>, vector<8x128xf32>
    %13 = arith.truncf %12 : vector<8x128xf32> to vector<8x128xbf16>
    %c0_8 = arith.constant 0 : index
    %c0_9 = arith.constant 0 : index
    %14 = vector.load %arg1[%c0_8, %c0_9] : memref<128x256xbf16, #tpu.memory_space<vmem>>, vector<128x256xbf16>
    %cst = arith.constant dense<0.000000e+00> : vector<8x256xf32>
    %15 = tpu.matmul %13, %14, %cst {dimension_numbers = #tpu.dot_dimension_numbers<[1], [0], [0], [1], [0, 0, 1, 1], [], []>} : vector<8x128xbf16>, vector<128x256xbf16>, vector<8x256xf32> -> vector<8x256xf32>
    %c0_10 = arith.constant 0 : index
    %c0_11 = arith.constant 0 : index
    %16 = vector.load %arg2[%c0_10, %c0_11] : memref<16x896xf32, #tpu.memory_space<vmem>>, vector<1x256xf32>
    %17 = vector.broadcast %16 : vector<1x256xf32> to vector<8x256xf32>
    %18 = arith.addf %15, %17 : vector<8x256xf32>
    %cst_12 = arith.constant 0.000000e+00 : f32
    %19 = vector.broadcast %cst_12 : f32 to vector<8x256xf32>
    %20 = arith.cmpf oge, %18, %19 : vector<8x256xf32>
    %cst_13 = arith.constant 0.00999999977 : f32
    %21 = vector.broadcast %cst_13 : f32 to vector<8x256xf32>
    %22 = arith.mulf %21, %18 : vector<8x256xf32>
    %23 = arith.select %20, %18, %22 : vector<8x256xi1>, vector<8x256xf32>
    %c1 = arith.constant 1 : index
    %c0_14 = arith.constant 0 : index
    %24 = vector.load %arg2[%c1, %c0_14] : memref<16x896xf32, #tpu.memory_space<vmem>>, vector<1x256xf32>
    %c2 = arith.constant 2 : index
    %c0_15 = arith.constant 0 : index
    %25 = vector.load %arg2[%c2, %c0_15] : memref<16x896xf32, #tpu.memory_space<vmem>>, vector<1x256xf32>
    %cst_16 = arith.constant dense<0.000000e+00> : vector<256xf32>
    %26 = vector.multi_reduction <add>, %23, %cst_16 [0] : vector<8x256xf32> to vector<256xf32>
    %27 = vector.shape_cast %26 : vector<256xf32> to vector<1x256xf32>
    %cst_17 = arith.constant 8.000000e+00 : f32
    %28 = vector.broadcast %cst_17 : f32 to vector<1x256xf32>
    %29 = arith.divf %27, %28 : vector<1x256xf32>
    %30 = vector.broadcast %29 : vector<1x256xf32> to vector<8x256xf32>
    %31 = arith.subf %23, %30 : vector<8x256xf32>
    %32 = arith.mulf %31, %31 : vector<8x256xf32>
    %cst_18 = arith.constant dense<0.000000e+00> : vector<256xf32>
    %33 = vector.multi_reduction <add>, %32, %cst_18 [0] : vector<8x256xf32> to vector<256xf32>
    %34 = vector.shape_cast %33 : vector<256xf32> to vector<1x256xf32>
    %cst_19 = arith.constant 8.000000e+00 : f32
    %35 = vector.broadcast %cst_19 : f32 to vector<1x256xf32>
    %36 = arith.divf %34, %35 : vector<1x256xf32>
    %cst_20 = arith.constant 9.99999974E-6 : f32
    %37 = vector.broadcast %cst_20 : f32 to vector<1x256xf32>
    %38 = arith.addf %36, %37 : vector<1x256xf32>
    %39 = math.rsqrt %38 : vector<1x256xf32>
    %40 = arith.mulf %24, %39 : vector<1x256xf32>
    %41 = arith.mulf %29, %40 : vector<1x256xf32>
    %42 = arith.subf %25, %41 : vector<1x256xf32>
    %43 = vector.broadcast %40 : vector<1x256xf32> to vector<8x256xf32>
    %44 = arith.mulf %23, %43 : vector<8x256xf32>
    %45 = vector.broadcast %42 : vector<1x256xf32> to vector<8x256xf32>
    %46 = arith.addf %44, %45 : vector<8x256xf32>
    %c0_i32_21 = arith.constant 0 : i32
    %47 = tpu.memref_slice %arg10[%c0_i32_21] : memref<4x!tpu.dma_semaphore, #tpu.memory_space<semaphore_mem>> -> memref<1x!tpu.dma_semaphore, #tpu.memory_space<semaphore_mem>>
    %48 = tpu.memref_squeeze %47 : memref<1x!tpu.dma_semaphore, #tpu.memory_space<semaphore_mem>> -> memref<!tpu.dma_semaphore, #tpu.memory_space<semaphore_mem>>
    tpu.wait_dma2 semaphore(%48 : memref<!tpu.dma_semaphore, #tpu.memory_space<semaphore_mem>>) src(%arg3 : memref<256x512xbf16, #tpu.memory_space<any>>) dst(%arg7 : memref<256x512xbf16, #tpu.memory_space<vmem>>)
    %49 = arith.truncf %46 : vector<8x256xf32> to vector<8x256xbf16>
    %c0_22 = arith.constant 0 : index
    %c0_23 = arith.constant 0 : index
    %50 = vector.load %arg7[%c0_22, %c0_23] : memref<256x512xbf16, #tpu.memory_space<vmem>>, vector<256x512xbf16>
    %cst_24 = arith.constant dense<0.000000e+00> : vector<8x512xf32>
    %51 = tpu.matmul %49, %50, %cst_24 {dimension_numbers = #tpu.dot_dimension_numbers<[1], [0], [0], [1], [0, 0, 1, 1], [], []>} : vector<8x256xbf16>, vector<256x512xbf16>, vector<8x512xf32> -> vector<8x512xf32>
    %c3 = arith.constant 3 : index
    %c0_25 = arith.constant 0 : index
    %52 = vector.load %arg2[%c3, %c0_25] : memref<16x896xf32, #tpu.memory_space<vmem>>, vector<1x512xf32>
    %53 = vector.broadcast %52 : vector<1x512xf32> to vector<8x512xf32>
    %54 = arith.addf %51, %53 : vector<8x512xf32>
    %cst_26 = arith.constant 0.000000e+00 : f32
    %55 = vector.broadcast %cst_26 : f32 to vector<8x512xf32>
    %56 = arith.cmpf oge, %54, %55 : vector<8x512xf32>
    %cst_27 = arith.constant 0.00999999977 : f32
    %57 = vector.broadcast %cst_27 : f32 to vector<8x512xf32>
    %58 = arith.mulf %57, %54 : vector<8x512xf32>
    %59 = arith.select %56, %54, %58 : vector<8x512xi1>, vector<8x512xf32>
    %c4 = arith.constant 4 : index
    %c0_28 = arith.constant 0 : index
    %60 = vector.load %arg2[%c4, %c0_28] : memref<16x896xf32, #tpu.memory_space<vmem>>, vector<1x512xf32>
    %c5 = arith.constant 5 : index
    %c0_29 = arith.constant 0 : index
    %61 = vector.load %arg2[%c5, %c0_29] : memref<16x896xf32, #tpu.memory_space<vmem>>, vector<1x512xf32>
    %cst_30 = arith.constant dense<0.000000e+00> : vector<512xf32>
    %62 = vector.multi_reduction <add>, %59, %cst_30 [0] : vector<8x512xf32> to vector<512xf32>
    %63 = vector.shape_cast %62 : vector<512xf32> to vector<1x512xf32>
    %cst_31 = arith.constant 8.000000e+00 : f32
    %64 = vector.broadcast %cst_31 : f32 to vector<1x512xf32>
    %65 = arith.divf %63, %64 : vector<1x512xf32>
    %66 = vector.broadcast %65 : vector<1x512xf32> to vector<8x512xf32>
    %67 = arith.subf %59, %66 : vector<8x512xf32>
    %68 = arith.mulf %67, %67 : vector<8x512xf32>
    %cst_32 = arith.constant dense<0.000000e+00> : vector<512xf32>
    %69 = vector.multi_reduction <add>, %68, %cst_32 [0] : vector<8x512xf32> to vector<512xf32>
    %70 = vector.shape_cast %69 : vector<512xf32> to vector<1x512xf32>
    %cst_33 = arith.constant 8.000000e+00 : f32
    %71 = vector.broadcast %cst_33 : f32 to vector<1x512xf32>
    %72 = arith.divf %70, %71 : vector<1x512xf32>
    %cst_34 = arith.constant 9.99999974E-6 : f32
    %73 = vector.broadcast %cst_34 : f32 to vector<1x512xf32>
    %74 = arith.addf %72, %73 : vector<1x512xf32>
    %75 = math.rsqrt %74 : vector<1x512xf32>
    %76 = arith.mulf %60, %75 : vector<1x512xf32>
    %77 = arith.mulf %65, %76 : vector<1x512xf32>
    %78 = arith.subf %61, %77 : vector<1x512xf32>
    %79 = vector.broadcast %76 : vector<1x512xf32> to vector<8x512xf32>
    %80 = arith.mulf %59, %79 : vector<8x512xf32>
    %81 = vector.broadcast %78 : vector<1x512xf32> to vector<8x512xf32>
    %82 = arith.addf %80, %81 : vector<8x512xf32>
    %83 = arith.truncf %82 : vector<8x512xf32> to vector<8x512xbf16>
    %c1_i32_35 = arith.constant 1 : i32
    %c0_i32_36 = arith.constant 0 : i32
    %c0_i32_37 = arith.constant 0 : i32
    %84 = tpu.memref_slice %arg4[%c0_i32_36, %c0_i32_37] : memref<512x896xbf16, #tpu.memory_space<any>> -> memref<256x896xbf16, #tpu.memory_space<any>>
    %c0_i32_38 = arith.constant 0 : i32
    %c0_i32_39 = arith.constant 0 : i32
    %85 = tpu.memref_slice %arg8[%c0_i32_38, %c0_i32_39] : memref<512x896xbf16, #tpu.memory_space<vmem>> -> memref<256x896xbf16, #tpu.memory_space<vmem>>
    %86 = tpu.memref_slice %arg10[%c1_i32_35] : memref<4x!tpu.dma_semaphore, #tpu.memory_space<semaphore_mem>> -> memref<1x!tpu.dma_semaphore, #tpu.memory_space<semaphore_mem>>
    %87 = tpu.memref_squeeze %86 : memref<1x!tpu.dma_semaphore, #tpu.memory_space<semaphore_mem>> -> memref<!tpu.dma_semaphore, #tpu.memory_space<semaphore_mem>>
    tpu.wait_dma2 semaphore(%87 : memref<!tpu.dma_semaphore, #tpu.memory_space<semaphore_mem>>) src(%84 : memref<256x896xbf16, #tpu.memory_space<any>>) dst(%85 : memref<256x896xbf16, #tpu.memory_space<vmem>>)
    %88 = vector.extract_strided_slice %83 {offsets = [0, 0], sizes = [8, 256], strides = [1, 1]} : vector<8x512xbf16> to vector<8x256xbf16>
    %c0_40 = arith.constant 0 : index
    %c0_41 = arith.constant 0 : index
    %89 = vector.load %arg8[%c0_40, %c0_41] : memref<512x896xbf16, #tpu.memory_space<vmem>>, vector<256x896xbf16>
    %cst_42 = arith.constant dense<0.000000e+00> : vector<8x896xf32>
    %90 = tpu.matmul %88, %89, %cst_42 {dimension_numbers = #tpu.dot_dimension_numbers<[1], [0], [0], [1], [0, 0, 1, 1], [], []>} : vector<8x256xbf16>, vector<256x896xbf16>, vector<8x896xf32> -> vector<8x896xf32>
    %c2_i32_43 = arith.constant 2 : i32
    %c256_i32_44 = arith.constant 256 : i32
    %c0_i32_45 = arith.constant 0 : i32
    %91 = tpu.memref_slice %arg4[%c256_i32_44, %c0_i32_45] : memref<512x896xbf16, #tpu.memory_space<any>> -> memref<256x896xbf16, #tpu.memory_space<any>>
    %c256_i32_46 = arith.constant 256 : i32
    %c0_i32_47 = arith.constant 0 : i32
    %92 = tpu.memref_slice %arg8[%c256_i32_46, %c0_i32_47] : memref<512x896xbf16, #tpu.memory_space<vmem>> -> memref<256x896xbf16, #tpu.memory_space<vmem>>
    %93 = tpu.memref_slice %arg10[%c2_i32_43] : memref<4x!tpu.dma_semaphore, #tpu.memory_space<semaphore_mem>> -> memref<1x!tpu.dma_semaphore, #tpu.memory_space<semaphore_mem>>
    %94 = tpu.memref_squeeze %93 : memref<1x!tpu.dma_semaphore, #tpu.memory_space<semaphore_mem>> -> memref<!tpu.dma_semaphore, #tpu.memory_space<semaphore_mem>>
    tpu.wait_dma2 semaphore(%94 : memref<!tpu.dma_semaphore, #tpu.memory_space<semaphore_mem>>) src(%91 : memref<256x896xbf16, #tpu.memory_space<any>>) dst(%92 : memref<256x896xbf16, #tpu.memory_space<vmem>>)
    %95 = vector.extract_strided_slice %83 {offsets = [0, 256], sizes = [8, 256], strides = [1, 1]} : vector<8x512xbf16> to vector<8x256xbf16>
    %c256 = arith.constant 256 : index
    %c0_48 = arith.constant 0 : index
    %96 = vector.load %arg8[%c256, %c0_48] : memref<512x896xbf16, #tpu.memory_space<vmem>>, vector<256x896xbf16>
    %cst_49 = arith.constant dense<0.000000e+00> : vector<8x896xf32>
    %97 = tpu.matmul %95, %96, %cst_49 {dimension_numbers = #tpu.dot_dimension_numbers<[1], [0], [0], [1], [0, 0, 1, 1], [], []>} : vector<8x256xbf16>, vector<256x896xbf16>, vector<8x896xf32> -> vector<8x896xf32>
    %98 = arith.addf %90, %97 : vector<8x896xf32>
    %c6 = arith.constant 6 : index
    %c0_50 = arith.constant 0 : index
    %99 = vector.load %arg2[%c6, %c0_50] : memref<16x896xf32, #tpu.memory_space<vmem>>, vector<1x896xf32>
    %100 = vector.broadcast %99 : vector<1x896xf32> to vector<8x896xf32>
    %101 = arith.addf %98, %100 : vector<8x896xf32>
    %cst_51 = arith.constant 0.000000e+00 : f32
    %102 = vector.broadcast %cst_51 : f32 to vector<8x896xf32>
    %103 = arith.cmpf oge, %101, %102 : vector<8x896xf32>
    %cst_52 = arith.constant 0.00999999977 : f32
    %104 = vector.broadcast %cst_52 : f32 to vector<8x896xf32>
    %105 = arith.mulf %104, %101 : vector<8x896xf32>
    %106 = arith.select %103, %101, %105 : vector<8x896xi1>, vector<8x896xf32>
    %c7 = arith.constant 7 : index
    %c0_53 = arith.constant 0 : index
    %107 = vector.load %arg2[%c7, %c0_53] : memref<16x896xf32, #tpu.memory_space<vmem>>, vector<1x896xf32>
    %c8 = arith.constant 8 : index
    %c0_54 = arith.constant 0 : index
    %108 = vector.load %arg2[%c8, %c0_54] : memref<16x896xf32, #tpu.memory_space<vmem>>, vector<1x896xf32>
    %cst_55 = arith.constant dense<0.000000e+00> : vector<896xf32>
    %109 = vector.multi_reduction <add>, %106, %cst_55 [0] : vector<8x896xf32> to vector<896xf32>
    %110 = vector.shape_cast %109 : vector<896xf32> to vector<1x896xf32>
    %cst_56 = arith.constant 8.000000e+00 : f32
    %111 = vector.broadcast %cst_56 : f32 to vector<1x896xf32>
    %112 = arith.divf %110, %111 : vector<1x896xf32>
    %113 = vector.broadcast %112 : vector<1x896xf32> to vector<8x896xf32>
    %114 = arith.subf %106, %113 : vector<8x896xf32>
    %115 = arith.mulf %114, %114 : vector<8x896xf32>
    %cst_57 = arith.constant dense<0.000000e+00> : vector<896xf32>
    %116 = vector.multi_reduction <add>, %115, %cst_57 [0] : vector<8x896xf32> to vector<896xf32>
    %117 = vector.shape_cast %116 : vector<896xf32> to vector<1x896xf32>
    %cst_58 = arith.constant 8.000000e+00 : f32
    %118 = vector.broadcast %cst_58 : f32 to vector<1x896xf32>
    %119 = arith.divf %117, %118 : vector<1x896xf32>
    %cst_59 = arith.constant 9.99999974E-6 : f32
    %120 = vector.broadcast %cst_59 : f32 to vector<1x896xf32>
    %121 = arith.addf %119, %120 : vector<1x896xf32>
    %122 = math.rsqrt %121 : vector<1x896xf32>
    %123 = arith.mulf %107, %122 : vector<1x896xf32>
    %124 = arith.mulf %112, %123 : vector<1x896xf32>
    %125 = arith.subf %108, %124 : vector<1x896xf32>
    %126 = vector.broadcast %123 : vector<1x896xf32> to vector<8x896xf32>
    %127 = arith.mulf %106, %126 : vector<8x896xf32>
    %128 = vector.broadcast %125 : vector<1x896xf32> to vector<8x896xf32>
    %129 = arith.addf %127, %128 : vector<8x896xf32>
    %c3_i32_60 = arith.constant 3 : i32
    %130 = tpu.memref_slice %arg10[%c3_i32_60] : memref<4x!tpu.dma_semaphore, #tpu.memory_space<semaphore_mem>> -> memref<1x!tpu.dma_semaphore, #tpu.memory_space<semaphore_mem>>
    %131 = tpu.memref_squeeze %130 : memref<1x!tpu.dma_semaphore, #tpu.memory_space<semaphore_mem>> -> memref<!tpu.dma_semaphore, #tpu.memory_space<semaphore_mem>>
    tpu.wait_dma2 semaphore(%131 : memref<!tpu.dma_semaphore, #tpu.memory_space<semaphore_mem>>) src(%arg5 : memref<896x128xbf16, #tpu.memory_space<any>>) dst(%arg9 : memref<896x128xbf16, #tpu.memory_space<vmem>>)
    %132 = arith.truncf %129 : vector<8x896xf32> to vector<8x896xbf16>
    %c0_61 = arith.constant 0 : index
    %c0_62 = arith.constant 0 : index
    %133 = vector.load %arg9[%c0_61, %c0_62] : memref<896x128xbf16, #tpu.memory_space<vmem>>, vector<896x128xbf16>
    %cst_63 = arith.constant dense<0.000000e+00> : vector<8x128xf32>
    %134 = tpu.matmul %132, %133, %cst_63 {dimension_numbers = #tpu.dot_dimension_numbers<[1], [0], [0], [1], [0, 0, 1, 1], [], []>} : vector<8x896xbf16>, vector<896x128xbf16>, vector<8x128xf32> -> vector<8x128xf32>
    %c9 = arith.constant 9 : index
    %c0_64 = arith.constant 0 : index
    %135 = vector.load %arg2[%c9, %c0_64] : memref<16x896xf32, #tpu.memory_space<vmem>>, vector<1x128xf32>
    %136 = vector.broadcast %135 : vector<1x128xf32> to vector<8x128xf32>
    %137 = arith.addf %134, %136 : vector<8x128xf32>
    %c0_65 = arith.constant 0 : index
    %c0_66 = arith.constant 0 : index
    %138 = vector.load %arg6[%c0_65, %c0_66] : memref<8x128xf32, #tpu.memory_space<vmem>>, vector<8x128xf32>
    tpu.vector_store %arg6[%c0_65, %c0_66], %137 {strides = array<i32>} : memref<8x128xf32, #tpu.memory_space<vmem>>, vector<8x128xf32>,
    return
  }
}

</mosaic_0001>

<llo_original>
// kernel: tpu_custom_call.1
$region0: #{tpu_custom_call.1}
  #allocation0 [shape = 'u32[]', space=smem, size = 0x4, offset = 0x4, fixed_abs, tag = 'smem constant byte address 0x4 - core index']
  #allocation1 [shape = 'u32[144,128]{1,0:T(1,128)}', space=vmem, size = 0x12000, scoped, tag = 'internal scratch']
  #allocation2 [shape = 'bf16[256,512]{1,0:T(16,128)(2,1)}', space=vmem, size = 0x40000, scoped, tag = 'scratch operand']
  #allocation3 [shape = 'bf16[512,896]{1,0:T(16,128)(2,1)}', space=vmem, size = 0xe0000, scoped, tag = 'scratch operand']
  #allocation4 [shape = 'bf16[896,128]{1,0:T(16,128)(2,1)}', space=vmem, size = 0x38000, scoped, tag = 'scratch operand']
  #allocation5 [shape = 's32[4]{0}', space=sflag, size = 0x10, scoped, tag = 'scratch operand']
  #allocation13 [shape = 's32[]', space=sflag, size = 0x4, offset = 0, fixed_abs, tag = 'sflag constant byte address 0x0 - dummy sync flag']
  #allocation15 [shape = 's32[]', space=sflag, size = 0x4, offset = 0, fixed_abs, tag = 'sflag constant byte address 0x0 - dummy sync flag']
  #allocation17 [shape = 's32[]', space=sflag, size = 0x4, offset = 0, fixed_abs, tag = 'sflag constant byte address 0x0 - dummy sync flag']
  #allocation19 [shape = 's32[]', space=sflag, size = 0x4, offset = 0, fixed_abs, tag = 'sflag constant byte address 0x0 - dummy sync flag']
  #allocation20 [shape = 's32[]', space=sflag, size = 0x4, offset = 0, fixed_abs, tag = 'sflag constant byte address 0x0 - dummy sync flag']
  #allocation21 [shape = 'u32[]', space=smem, size = 0x4, offset = 0x44, fixed_abs, tag = 'smem constant byte address 0x44 - assertion arg 0']
  #allocation22 [shape = 'u32[]', space=smem, size = 0x4, offset = 0x48, fixed_abs, tag = 'smem constant byte address 0x48 - assertion arg 1']
  %s0 = inlined_call_operand.hbm [shape: f32[8,128], index: 0, kind: input, shape index: {}]
  %s1 = inlined_call_operand.hbm [shape: bf16[128,256], index: 1, kind: input, shape index: {}]
  %s2 = inlined_call_operand.hbm [shape: f32[16,896], index: 2, kind: input, shape index: {}]
  %s3 = inlined_call_operand.hbm [shape: bf16[256,512], index: 3, kind: input, shape index: {}]
  %s4 = inlined_call_operand.hbm [shape: bf16[512,896], index: 4, kind: input, shape index: {}]
  %s5 = inlined_call_operand.hbm [shape: bf16[896,128], index: 5, kind: input, shape index: {}]
  %s6 = inlined_call_operand.hbm [shape: f32[8,128], index: 6, kind: output, shape index: {}]
  %s7 = sld [smem:[#allocation0]]
  $region38: #{tpu_custom_call.1} parent=0
    _
  %s9 = ssub.s32 1, %s7
  %s10 = scalar_select 0, %s9, %s7
  $region1: #{tpu_custom_call.1} parent=0
    #allocation6 [shape = 'u8[4096]{0}', space=vmem, size = 0x1000, scoped, tag = 'input window, operand 0, single buffered']
    #allocation7 [shape = 's32[1]{0}', space=sflag, size = 0x4, scoped, tag = 'scoped memory for tpu_custom_call.1']
    #allocation8 [shape = 's32[1]{0}', space=sflag, size = 0x4, scoped, tag = 'scoped memory for tpu_custom_call.1']
    #allocation9 [shape = 'u8[65536]{0}', space=vmem, size = 0x10000, scoped, tag = 'input window, operand 1, single buffered']
    #allocation10 [shape = 's32[1]{0}', space=sflag, size = 0x4, scoped, tag = 'scoped memory for tpu_custom_call.1']
    #allocation11 [shape = 'u8[57344]{0}', space=vmem, size = 0xe000, scoped, tag = 'input window, operand 2, single buffered']
    #allocation12 [shape = 'u8[4096]{0}', space=vmem, size = 0x1000, scoped, tag = 'output window, operand 0, single buffered']
    #allocation14 [shape = 'u32[9]{0}', space=smem, size = 0x24, scoped, tag = 'DMA stride descriptor']
    #allocation16 [shape = 'u32[9]{0}', space=smem, size = 0x24, scoped, tag = 'DMA stride descriptor']
    #allocation18 [shape = 'u32[9]{0}', space=smem, size = 0x24, scoped, tag = 'DMA stride descriptor']
    %11 = vsyncpa [#allocation7], 0
    %12 = vsyncpa [#allocation10], 0
    %13 = vsyncpa [#allocation8], 0
    // Predicated region
    $region2: #{tpu_custom_call.1} parent=1 // pred_check
      _
    $region3: #{tpu_custom_call.1} parent=1 // pred_check_branch
      %15 = sbr.rel (0) target = $region5
    $region4: #{tpu_custom_call.1} parent=1 // pred_region
      %s17 = ssub.s32 128, 128
      %18 = vsyncadd [#allocation7], %s17
      %s20 = sshll.u32 [#allocation6], 4
      %s21 = int_to_ptr.vmem [resolvable:$true] %s20
      %23 = dma.hbm_to_vmem [thread:$0]  %s0, 128, %s21, [#allocation7]
    $region5: #{tpu_custom_call.1} parent=1 // pred_fallthru
      _
    // Predicated region
    $region6: #{tpu_custom_call.1} parent=1 // pred_check
      _
    $region7: #{tpu_custom_call.1} parent=1 // pred_check_branch
      %25 = sbr.rel (0) target = $region9
    $region8: #{tpu_custom_call.1} parent=1 // pred_region
      %s27 = ssub.s32 2048, 2048
      %28 = vsyncadd [#allocation10], %s27
      %s29 = sshll.u32 [#allocation9], 4
      %s30 = int_to_ptr.vmem [resolvable:$true] %s29
      %35 = dma.hbm_to_vmem [thread:$0]  %s1, 2048, %s30, [#allocation10], 128, 128, 8
    $region9: #{tpu_custom_call.1} parent=1 // pred_fallthru
      _
    // Predicated region
    $region10: #{tpu_custom_call.1} parent=1 // pred_check
      _
    $region11: #{tpu_custom_call.1} parent=1 // pred_check_branch
      %37 = sbr.rel (0) target = $region13
    $region12: #{tpu_custom_call.1} parent=1 // pred_region
      %s39 = ssub.s32 1792, 1792
      %40 = vsyncadd [#allocation10], %s39
      %s41 = sshll.u32 [#allocation11], 4
      %s42 = int_to_ptr.vmem [resolvable:$true] %s41
      %47 = dma.hbm_to_vmem [thread:$0]  %s2, 1792, %s42, [#allocation10], 896, 896, 56
    $region13: #{tpu_custom_call.1} parent=1 // pred_fallthru
      _
    // Predicated region
    $region14: #{tpu_custom_call.1} parent=1 // pred_check
      _
    $region15: #{tpu_custom_call.1} parent=1 // pred_check_branch
      %49 = sbr.rel (0) target = $region17
    $region16: #{tpu_custom_call.1} parent=1 // pred_region
      %50 = dma.done [#allocation7], 128
    $region17: #{tpu_custom_call.1} parent=1 // pred_fallthru
      _
    // Predicated region
    $region18: #{tpu_custom_call.1} parent=1 // pred_check
      _
    $region19: #{tpu_custom_call.1} parent=1 // pred_check_branch
      %52 = sbr.rel (0) target = $region21
    $region20: #{tpu_custom_call.1} parent=1 // pred_region
      %53 = dma.done [#allocation10], 2048
    $region21: #{tpu_custom_call.1} parent=1 // pred_fallthru
      _
    // Predicated region
    $region22: #{tpu_custom_call.1} parent=1 // pred_check
      _
    $region23: #{tpu_custom_call.1} parent=1 // pred_check_branch
      %55 = sbr.rel (0) target = $region25
    $region24: #{tpu_custom_call.1} parent=1 // pred_region
      %56 = dma.done [#allocation10], 1792
    $region25: #{tpu_custom_call.1} parent=1 // pred_fallthru
      _
    %s59 = sshll.u32 1, 14
    %s60 = sxor.u32 4294967295, %s59
    %s62 = sld [smem:[#allocation0]]
    %s63 = sadd.s32 2, %s62
    %s65 = sshll.u32 7, 26
    %s66 = sxor.u32 4294967295, %s65
    %s67 = sand.u32 0, %s66
    %s68 = sshll.u32 %s63, 26
    %s69 = sor.u32 %s67, %s68
    %s70 = sshll.u32 [#allocation2], 4
    %s71 = int_to_ptr.vmem [resolvable:$true] %s70
    %74 = sst [smem:[#allocation14]] 512
    %s75 = scalar_lea.smem [#allocation14], 1
    %76 = sst [smem:[%s75]] 512
    %s77 = scalar_lea.smem [#allocation14], 2
    %78 = sst [smem:[%s77]] 4
    %s79 = scalar_lea.smem [#allocation14], 3
    %80 = sst [smem:[%s79]] 64
    %s81 = scalar_lea.smem [#allocation14], 4
    %82 = sst [smem:[%s81]] 128
    %s83 = scalar_lea.smem [#allocation14], 5
    %84 = sst [smem:[%s83]] 2
    %s85 = scalar_lea.smem [#allocation14], 6
    %86 = sst [smem:[%s85]] 256
    %s87 = scalar_lea.smem [#allocation14], 7
    %88 = sst [smem:[%s87]] 64
    %s89 = scalar_lea.smem [#allocation14], 8
    %90 = sst [smem:[%s89]] 4
    %92 = dma.general %s3, 8192, %s71, [#allocation5], [#allocation13], [#allocation14], %s69, 0
    %s93 = scalar_lea.sflag [#allocation5], 1
    %s95 = sshll.u32 1, 14
    %s96 = sxor.u32 4294967295, %s95
    %s98 = sadd.s32 2, %s62
    %s100 = sshll.u32 7, 26
    %s101 = sxor.u32 4294967295, %s100
    %s102 = sand.u32 0, %s101
    %s103 = sshll.u32 %s98, 26
    %s104 = sor.u32 %s102, %s103
    %s105 = sshll.u32 [#allocation3], 4
    %s106 = int_to_ptr.vmem [resolvable:$true] %s105
    %109 = sst [smem:[#allocation16]] 896
    %s110 = scalar_lea.smem [#allocation16], 1
    %111 = sst [smem:[%s110]] 896
    %s112 = scalar_lea.smem [#allocation16], 2
    %113 = sst [smem:[%s112]] 7
    %s114 = scalar_lea.smem [#allocation16], 3
    %115 = sst [smem:[%s114]] 64
    %s116 = scalar_lea.smem [#allocation16], 4
    %117 = sst [smem:[%s116]] 128
    %s118 = scalar_lea.smem [#allocation16], 5
    %119 = sst [smem:[%s118]] 2
    %s120 = scalar_lea.smem [#allocation16], 6
    %121 = sst [smem:[%s120]] 448
    %s122 = scalar_lea.smem [#allocation16], 7
    %123 = sst [smem:[%s122]] 64
    %s124 = scalar_lea.smem [#allocation16], 8
    %125 = sst [smem:[%s124]] 4
    %127 = dma.general %s4, 14336, %s106, %s93, [#allocation15], [#allocation16], %s104, 0
    %s128 = scalar_lea.hbm %s4, 14336
    %s129 = scalar_lea.vmem [#allocation3], 896
    %s130 = scalar_lea.sflag [#allocation5], 2
    %s132 = sshll.u32 1, 14
    %s133 = sxor.u32 4294967295, %s132
    %s135 = sadd.s32 2, %s62
    %s137 = sshll.u32 7, 26
    %s138 = sxor.u32 4294967295, %s137
    %s139 = sand.u32 0, %s138
    %s140 = sshll.u32 %s135, 26
    %s141 = sor.u32 %s139, %s140
    %s142 = sshll.u32 %s129, 4
    %s143 = int_to_ptr.vmem [resolvable:$true] %s142
    %146 = sst [smem:[#allocation18]] 896
    %s147 = scalar_lea.smem [#allocation18], 1
    %148 = sst [smem:[%s147]] 896
    %s149 = scalar_lea.smem [#allocation18], 2
    %150 = sst [smem:[%s149]] 7
    %s151 = scalar_lea.smem [#allocation18], 3
    %152 = sst [smem:[%s151]] 64
    %s153 = scalar_lea.smem [#allocation18], 4
    %154 = sst [smem:[%s153]] 128
    %s155 = scalar_lea.smem [#allocation18], 5
    %156 = sst [smem:[%s155]] 2
    %s157 = scalar_lea.smem [#allocation18], 6
    %158 = sst [smem:[%s157]] 448
    %s159 = scalar_lea.smem [#allocation18], 7
    %160 = sst [smem:[%s159]] 64
    %s161 = scalar_lea.smem [#allocation18], 8
    %162 = sst [smem:[%s161]] 4
    %164 = dma.general %s128, 14336, %s143, %s130, [#allocation17], [#allocation18], %s141, 0
    %s165 = scalar_lea.sflag [#allocation5], 3
    // Predicated region
    $region26: #{tpu_custom_call.1} parent=1 // pred_check
      _
    $region27: #{tpu_custom_call.1} parent=1 // pred_check_branch
      %167 = sbr.rel target = $region29
    $region28: #{tpu_custom_call.1} parent=1 // pred_region
      %168 = sst [smem:[#allocation21]] [#allocation20]
      %169 = sst [smem:[#allocation22]] [#allocation19]
    $region29: #{tpu_custom_call.1} parent=1 // pred_fallthru
      _
    %171 = shalt.err (0)
    %s173 = sshll.u32 [#allocation4], 4
    %s174 = int_to_ptr.vmem [resolvable:$true] %s173
    %176 = dma.hbm_to_vmem [thread:$0]  %s5, 7168, %s174, %s165
    %v177 = vld [vmem:[#allocation6] sm:$0xff]
    %v178 = vpack.c.bf16 %v177, %v177
    %v179 = vld [vmem:[#allocation9] sm:$0xff]
    %v180 = vld [vmem:[#allocation9 + $0x8] sm:$0xff]
    %v181 = vld [vmem:[#allocation9 + $0x10] sm:$0xff]
    %v182 = vld [vmem:[#allocation9 + $0x18] sm:$0xff]
    %v183 = vld [vmem:[#allocation9 + $0x20] sm:$0xff]
    %v184 = vld [vmem:[#allocation9 + $0x28] sm:$0xff]
    %v185 = vld [vmem:[#allocation9 + $0x30] sm:$0xff]
    %v186 = vld [vmem:[#allocation9 + $0x38] sm:$0xff]
    %v187 = vld [vmem:[#allocation9 + $0x40] sm:$0xff]
    %v188 = vld [vmem:[#allocation9 + $0x48] sm:$0xff]
    %v189 = vld [vmem:[#allocation9 + $0x50] sm:$0xff]
    %v190 = vld [vmem:[#allocation9 + $0x58] sm:$0xff]
    %v191 = vld [vmem:[#allocation9 + $0x60] sm:$0xff]
    %v192 = vld [vmem:[#allocation9 + $0x68] sm:$0xff]
    %v193 = vld [vmem:[#allocation9 + $0x70] sm:$0xff]
    %v194 = vld [vmem:[#allocation9 + $0x78] sm:$0xff]
    %v195 = vld [vmem:[#allocation11] ss:$8 sm:$0x3]
    %v197 = vlaneseq
    %v198 = vshrl.u32 %v197, 7
    %v199 = vsub.s32 0, %v198
    %v200 = vrot.slane %v195, %v199
    %v201 = vlaneseq
    %v202 = vshrl.u32 %v201, 7
    %v203 = vsub.s32 1, %v202
    %v204 = vrot.slane %v195, %v203
    %v223 = vunpack.c.l.b16 %v179
    %v224 = vunpack.c.h.b16 %v179
    %v225 = vunpack.c.l.b16 %v180
    %v226 = vunpack.c.h.b16 %v180
    %v227 = vunpack.c.l.b16 %v181
    %v228 = vunpack.c.h.b16 %v181
    %v229 = vunpack.c.l.b16 %v182
    %v230 = vunpack.c.h.b16 %v182
    %v231 = vunpack.c.l.b16 %v183
    %v232 = vunpack.c.h.b16 %v183
    %v233 = vunpack.c.l.b16 %v184
    %v234 = vunpack.c.h.b16 %v184
    %v235 = vunpack.c.l.b16 %v185
    %v236 = vunpack.c.h.b16 %v185
    %v237 = vunpack.c.l.b16 %v186
    %v238 = vunpack.c.h.b16 %v186
    %v239 = vunpack.c.l.b16 %v187
    %v240 = vunpack.c.h.b16 %v187
    %v241 = vunpack.c.l.b16 %v188
    %v242 = vunpack.c.h.b16 %v188
    %v243 = vunpack.c.l.b16 %v189
    %v244 = vunpack.c.h.b16 %v189
    %v245 = vunpack.c.l.b16 %v190
    %v246 = vunpack.c.h.b16 %v190
    %v247 = vunpack.c.l.b16 %v191
    %v248 = vunpack.c.h.b16 %v191
    %v249 = vunpack.c.l.b16 %v192
    %v250 = vunpack.c.h.b16 %v192
    %v251 = vunpack.c.l.b16 %v193
    %v252 = vunpack.c.h.b16 %v193
    %v253 = vunpack.c.l.b16 %v194
    %v254 = vunpack.c.h.b16 %v194
    %v255 = vpack.c.b16 %v225, %v223
    %v256 = vpack.c.b16 %v226, %v224
    %v257 = vpack.c.b16 %v229, %v227
    %v258 = vpack.c.b16 %v230, %v228
    %v259 = vpack.c.b16 %v233, %v231
    %v260 = vpack.c.b16 %v234, %v232
    %v261 = vpack.c.b16 %v237, %v235
    %v262 = vpack.c.b16 %v238, %v236
    %v263 = vpack.c.b16 %v241, %v239
    %v264 = vpack.c.b16 %v242, %v240
    %v265 = vpack.c.b16 %v245, %v243
    %v266 = vpack.c.b16 %v246, %v244
    %v267 = vpack.c.b16 %v249, %v247
    %v268 = vpack.c.b16 %v250, %v248
    %v269 = vpack.c.b16 %v253, %v251
    %v270 = vpack.c.b16 %v254, %v252
    %287 = vmatprep.subr.bf16.mxu0 %v256
    %288 = vmatpush1.bf16.msra.mxu0 %v255
    %289 = vmatprep.subr.bf16.mxu0 %v258
    %290 = vmatpush1.bf16.msra.mxu0 %v257
    %291 = vmatprep.subr.bf16.mxu0 %v260
    %292 = vmatpush1.bf16.msra.mxu0 %v259
    %293 = vmatprep.subr.bf16.mxu0 %v262
    %294 = vmatpush1.bf16.msra.mxu0 %v261
    %295 = vmatprep.subr.bf16.mxu0 %v264
    %296 = vmatpush1.bf16.msra.mxu0 %v263
    %297 = vmatprep.subr.bf16.mxu0 %v266
    %298 = vmatpush1.bf16.msra.mxu0 %v265
    %299 = vmatprep.subr.bf16.mxu0 %v268
    %300 = vmatpush1.bf16.msra.mxu0 %v267
    %301 = vmatprep.subr.bf16.mxu0 %v270
    %302 = vmatpush1.bf16.msra.mxu0 %v269
    %303 = vmatprep.subr.bf16.mxu0 0
    %304 = vmatpush1.bf16.msra.mxu0 0
    %305 = vmatprep.subr.bf16.mxu0 0
    %306 = vmatpush1.bf16.msra.mxu0 0
    %307 = vmatprep.subr.bf16.mxu0 0
    %308 = vmatpush1.bf16.msra.mxu0 0
    %309 = vmatprep.subr.bf16.mxu0 0
    %310 = vmatpush1.bf16.msra.mxu0 0
    %311 = vmatprep.subr.bf16.mxu0 0
    %312 = vmatpush1.bf16.msra.mxu0 0
    %313 = vmatprep.subr.bf16.mxu0 0
    %314 = vmatpush1.bf16.msra.mxu0 0
    %315 = vmatprep.subr.bf16.mxu0 0
    %316 = vmatpush1.bf16.msra.mxu0 0
    %317 = vmatprep.subr.bf16.mxu0 0
    %318 = vmatpush1.bf16.msra.mxu0 0
    %319 = vmatprep.mubr.bf16.mxu0 0
    %320 = vmatmul.mubr.bf16.gmra.mrb[0].mxu0 %v178
    %v321 = vpop.f32.mrb[0].mxu0
    %v322 = vadd.f32 %v200, %v321
    %v323 = vpop.f32.mrb[0].mxu0
    %v324 = vadd.f32 %v204, %v323
    %v325 = vpop.f32.mrb[0].mxu0
    %v326 = vpop.f32.mrb[0].mxu0
    %327 = vdwg.mxu0
    %vm328 = vcmp.ge.f32.partialorder %v322, 0.0
    %vm329 = vcmp.ge.f32.partialorder %v324, 0.0
    %v330 = vmul.f32 %v322, 0.01
    %v331 = vmul.f32 %v324, 0.01
    %v332 = vsel %vm328, %v322, %v330
    %v333 = vsel %vm329, %v324, %v331
    %s334 = scalar_lea.vmem [#allocation11], 1
    %v335 = vld [vmem:[%s334] ss:$8 sm:$0x3]
    %s336 = scalar_lea.vmem [#allocation11], 2
    %v337 = vld [vmem:[%s336] ss:$8 sm:$0x3]
    %v338 = vrot.slane %v332, 4
    %v339 = vadd.f32 %v332, %v338
    %v340 = vrot.slane %v339, 2
    %v341 = vadd.f32 %v339, %v340
    %v342 = vrot.slane %v341, 1
    %v343 = vadd.f32 %v341, %v342
    %v344 = vrot.slane %v333, 4
    %v345 = vadd.f32 %v333, %v344
    %v346 = vrot.slane %v345, 2
    %v347 = vadd.f32 %v345, %v346
    %v348 = vrot.slane %v347, 1
    %v349 = vadd.f32 %v347, %v348
    %v350 = vrcp.pop 8.0
    %v351 = vmul.f32 %v343, %v350
    %v352 = vmul.f32 %v349, %v350
    %v353 = vsub.f32 %v332, %v351
    %v354 = vsub.f32 %v333, %v352
    %v355 = vmul.f32 %v353, %v353
    %v356 = vmul.f32 %v354, %v354
    %v357 = vrot.slane %v355, 4
    %v358 = vadd.f32 %v355, %v357
    %v359 = vrot.slane %v358, 2
    %v360 = vadd.f32 %v358, %v359
    %v361 = vrot.slane %v360, 1
    %v362 = vadd.f32 %v360, %v361
    %v363 = vrot.slane %v356, 4
    %v364 = vadd.f32 %v356, %v363
    %v365 = vrot.slane %v364, 2
    %v366 = vadd.f32 %v364, %v365
    %v367 = vrot.slane %v366, 1
    %v368 = vadd.f32 %v366, %v367
    %v369 = vmul.f32 %v362, %v350
    %v370 = vmul.f32 %v368, %v350
    %v371 = vadd.f32 %v369, 1e-05
    %v372 = vadd.f32 %v370, 1e-05
    %v373 = vrsqrt.pop %v371
    %v374 = vrsqrt.pop %v372
    %v377 = vcombine.low %v373, %v374
    %v379 = vunpack.c.l.s4 1966171168
    %v380 = vunpack.c.0.s8 %v379
    %v381 = vlaneseq
    %v382 = vshrl.u32 %v381, 7
    %v383 = vsub.s32 %v380, %v382
    %v384 = vrot.slane %v377, %v383
    %v386 = vunpack.c.l.s4 1966171168
    %v387 = vunpack.c.0.s8 %v386
    %v388 = vlaneseq
    %v389 = vshrl.u32 %v388, 7
    %v390 = vsub.s32 %v387, %v389
    %v391 = vrot.slane %v384, %v390
    %v393 = vmul.f32 %v335, %v391
    %v395 = vlaneseq
    %v396 = vshrl.u32 %v395, 7
    %v397 = vsub.s32 0, %v396
    %v398 = vrot.slane %v393, %v397
    %v399 = vlaneseq
    %v400 = vshrl.u32 %v399, 7
    %v401 = vsub.s32 1, %v400
    %v402 = vrot.slane %v393, %v401
    %v405 = vmul.f32 %v351, %v398
    %v406 = vmul.f32 %v352, %v402
    %v409 = vcombine.low %v405, %v406
    %v411 = vunpack.c.l.s4 1966171168
    %v412 = vunpack.c.0.s8 %v411
    %v413 = vlaneseq
    %v414 = vshrl.u32 %v413, 7
    %v415 = vsub.s32 %v412, %v414
    %v416 = vrot.slane %v409, %v415
    %v418 = vunpack.c.l.s4 1966171168
    %v419 = vunpack.c.0.s8 %v418
    %v420 = vlaneseq
    %v421 = vshrl.u32 %v420, 7
    %v422 = vsub.s32 %v419, %v421
    %v423 = vrot.slane %v416, %v422
    %v425 = vsub.f32 %v337, %v423
    %v426 = vmul.f32 %v332, %v398
    %v427 = vmul.f32 %v333, %v402
    %v429 = vlaneseq
    %v430 = vshrl.u32 %v429, 7
    %v431 = vsub.s32 0, %v430
    %v432 = vrot.slane %v425, %v431
    %v433 = vlaneseq
    %v434 = vshrl.u32 %v433, 7
    %v435 = vsub.s32 1, %v434
    %v436 = vrot.slane %v425, %v435
    %v439 = vadd.f32 %v426, %v432
    %v440 = vadd.f32 %v427, %v436
    %s441 = smul.u32 4, 32
    %s442 = smul.u32 %s441, 4
    %s443 = sshll.u32 %s442, 4
    %444 = dma.done [#allocation5], %s443
    %v445 = vpack.c.bf16 %v439, %v439
    %v446 = vpack.c.bf16 %v440, %v440
    %v447 = vld [vmem:[#allocation2] sm:$0xff]
    %v448 = vld [vmem:[#allocation2 + $0x8] sm:$0xff]
    %v449 = vld [vmem:[#allocation2 + $0x10] sm:$0xff]
    %v450 = vld [vmem:[#allocation2 + $0x18] sm:$0xff]
    %v451 = vld [vmem:[#allocation2 + $0x20] sm:$0xff]
    %v452 = vld [vmem:[#allocation2 + $0x28] sm:$0xff]
    %v453 = vld [vmem:[#allocation2 + $0x30] sm:$0xff]
    %v454 = vld [vmem:[#allocation2 + $0x38] sm:$0xff]
    %v455 = vld [vmem:[#allocation2 + $0x40] sm:$0xff]
    %v456 = vld [vmem:[#allocation2 + $0x48] sm:$0xff]
    %v457 = vld [vmem:[#allocation2 + $0x50] sm:$0xff]
    %v458 = vld [vmem:[#allocation2 + $0x58] sm:$0xff]
    %v459 = vld [vmem:[#allocation2 + $0x60] sm:$0xff]
    %v460 = vld [vmem:[#allocation2 + $0x68] sm:$0xff]
    %v461 = vld [vmem:[#allocation2 + $0x70] sm:$0xff]
    %v462 = vld [vmem:[#allocation2 + $0x78] sm:$0xff]
    %v463 = vld [vmem:[#allocation2 + $0x80] sm:$0xff]
    %v464 = vld [vmem:[#allocation2 + $0x88] sm:$0xff]
    %v465 = vld [vmem:[#allocation2 + $0x90] sm:$0xff]
    %v466 = vld [vmem:[#allocation2 + $0x98] sm:$0xff]
    %v467 = vld [vmem:[#allocation2 + $0xa0] sm:$0xff]
    %v468 = vld [vmem:[#allocation2 + $0xa8] sm:$0xff]
    %v469 = vld [vmem:[#allocation2 + $0xb0] sm:$0xff]
    %v470 = vld [vmem:[#allocation2 + $0xb8] sm:$0xff]
    %v471 = vld [vmem:[#allocation2 + $0xc0] sm:$0xff]
    %v472 = vld [vmem:[#allocation2 + $0xc8] sm:$0xff]
    %v473 = vld [vmem:[#allocation2 + $0xd0] sm:$0xff]
    %v474 = vld [vmem:[#allocation2 + $0xd8] sm:$0xff]
    %v475 = vld [vmem:[#allocation2 + $0xe0] sm:$0xff]
    %v476 = vld [vmem:[#allocation2 + $0xe8] sm:$0xff]
    %v477 = vld [vmem:[#allocation2 + $0xf0] sm:$0xff]
    %v478 = vld [vmem:[#allocation2 + $0xf8] sm:$0xff]
    %v479 = vld [vmem:[#allocation2 + $0x100] sm:$0xff]
    %v480 = vld [vmem:[#allocation2 + $0x108] sm:$0xff]
    %v481 = vld [vmem:[#allocation2 + $0x110] sm:$0xff]
    %v482 = vld [vmem:[#allocation2 + $0x118] sm:$0xff]
    %v483 = vld [vmem:[#allocation2 + $0x120] sm:$0xff]
    %v484 = vld [vmem:[#allocation2 + $0x128] sm:$0xff]
    %v485 = vld [vmem:[#allocation2 + $0x130] sm:$0xff]
    %v486 = vld [vmem:[#allocation2 + $0x138] sm:$0xff]
    %v487 = vld [vmem:[#allocation2 + $0x140] sm:$0xff]
    %v488 = vld [vmem:[#allocation2 + $0x148] sm:$0xff]
    %v489 = vld [vmem:[#allocation2 + $0x150] sm:$0xff]
    %v490 = vld [vmem:[#allocation2 + $0x158] sm:$0xff]
    %v491 = vld [vmem:[#allocation2 + $0x160] sm:$0xff]
    %v492 = vld [vmem:[#allocation2 + $0x168] sm:$0xff]
    %v493 = vld [vmem:[#allocation2 + $0x170] sm:$0xff]
    %v494 = vld [vmem:[#allocation2 + $0x178] sm:$0xff]
    %v495 = vld [vmem:[#allocation2 + $0x180] sm:$0xff]
    %v496 = vld [vmem:[#allocation2 + $0x188] sm:$0xff]
    %v497 = vld [vmem:[#allocation2 + $0x190] sm:$0xff]
    %v498 = vld [vmem:[#allocation2 + $0x198] sm:$0xff]
    %v499 = vld [vmem:[#allocation2 + $0x1a0] sm:$0xff]
    %v500 = vld [vmem:[#allocation2 + $0x1a8] sm:$0xff]
    %v501 = vld [vmem:[#allocation2 + $0x1b0] sm:$0xff]
    %v502 = vld [vmem:[#allocation2 + $0x1b8] sm:$0xff]
    %v503 = vld [vmem:[#allocation2 + $0x1c0] sm:$0xff]
    %v504 = vld [vmem:[#allocation2 + $0x1c8] sm:$0xff]
    %v505 = vld [vmem:[#allocation2 + $0x1d0] sm:$0xff]
    %v506 = vld [vmem:[#allocation2 + $0x1d8] sm:$0xff]
    %v507 = vld [vmem:[#allocation2 + $0x1e0] sm:$0xff]
    %v508 = vld [vmem:[#allocation2 + $0x1e8] sm:$0xff]
    %v509 = vld [vmem:[#allocation2 + $0x1f0] sm:$0xff]
    %v510 = vld [vmem:[#allocation2 + $0x1f8] sm:$0xff]
    %s511 = scalar_lea.vmem [#allocation11], 3
    %v512 = vld [vmem:[%s511] ss:$8 sm:$0xf]
    %v514 = vlaneseq
    %v515 = vshrl.u32 %v514, 7
    %v516 = vsub.s32 0, %v515
    %v517 = vrot.slane %v512, %v516
    %v518 = vlaneseq
    %v519 = vshrl.u32 %v518, 7
    %v520 = vsub.s32 1, %v519
    %v521 = vrot.slane %v512, %v520
    %v522 = vlaneseq
    %v523 = vshrl.u32 %v522, 7
    %v524 = vsub.s32 2, %v523
    %v525 = vrot.slane %v512, %v524
    %v526 = vlaneseq
    %v527 = vshrl.u32 %v526, 7
    %v528 = vsub.s32 3, %v527
    %v529 = vrot.slane %v512, %v528
    %534 = vmatprep.subr.bf16.mxu0 %v448
    %535 = vmatpush1.bf16.msra.mxu0 %v447
    %536 = vmatprep.subr.bf16.mxu0 %v452
    %537 = vmatpush1.bf16.msra.mxu0 %v451
    %538 = vmatprep.subr.bf16.mxu0 %v456
    %539 = vmatpush1.bf16.msra.mxu0 %v455
    %540 = vmatprep.subr.bf16.mxu0 %v460
    %541 = vmatpush1.bf16.msra.mxu0 %v459
    %542 = vmatprep.subr.bf16.mxu0 %v464
    %543 = vmatpush1.bf16.msra.mxu0 %v463
    %544 = vmatprep.subr.bf16.mxu0 %v468
    %545 = vmatpush1.bf16.msra.mxu0 %v467
    %546 = vmatprep.subr.bf16.mxu0 %v472
    %547 = vmatpush1.bf16.msra.mxu0 %v471
    %548 = vmatprep.subr.bf16.mxu0 %v476
    %549 = vmatpush1.bf16.msra.mxu0 %v475
    %550 = vmatprep.subr.bf16.mxu0 %v480
    %551 = vmatpush1.bf16.msra.mxu0 %v479
    %552 = vmatprep.subr.bf16.mxu0 %v484
    %553 = vmatpush1.bf16.msra.mxu0 %v483
    %554 = vmatprep.subr.bf16.mxu0 %v488
    %555 = vmatpush1.bf16.msra.mxu0 %v487
    %556 = vmatprep.subr.bf16.mxu0 %v492
    %557 = vmatpush1.bf16.msra.mxu0 %v491
    %558 = vmatprep.subr.bf16.mxu0 %v496
    %559 = vmatpush1.bf16.msra.mxu0 %v495
    %560 = vmatprep.subr.bf16.mxu0 %v500
    %561 = vmatpush1.bf16.msra.mxu0 %v499
    %562 = vmatprep.subr.bf16.mxu0 %v504
    %563 = vmatpush1.bf16.msra.mxu0 %v503
    %564 = vmatprep.subr.bf16.mxu0 %v508
    %565 = vmatpush1.bf16.msra.mxu0 %v507
    %566 = vmatprep.mubr.bf16.mxu0 %v446
    %567 = vmatmul.mubr.bf16.gmra.mrb[0].mxu0 %v445
    %v568 = vpop.f32.mrb[0].mxu0
    %v569 = vadd.f32 %v517, %v568
    %v570 = vpop.f32.mrb[0].mxu0
    %v571 = vadd.f32 %v521, %v570
    %v572 = vpop.f32.mrb[0].mxu0
    %v573 = vpop.f32.mrb[0].mxu0
    %574 = vdwg.mxu0
    %575 = vmatprep.subr.bf16.mxu0 %v450
    %576 = vmatpush1.bf16.msra.mxu0 %v449
    %577 = vmatprep.subr.bf16.mxu0 %v454
    %578 = vmatpush1.bf16.msra.mxu0 %v453
    %579 = vmatprep.subr.bf16.mxu0 %v458
    %580 = vmatpush1.bf16.msra.mxu0 %v457
    %581 = vmatprep.subr.bf16.mxu0 %v462
    %582 = vmatpush1.bf16.msra.mxu0 %v461
    %583 = vmatprep.subr.bf16.mxu0 %v466
    %584 = vmatpush1.bf16.msra.mxu0 %v465
    %585 = vmatprep.subr.bf16.mxu0 %v470
    %586 = vmatpush1.bf16.msra.mxu0 %v469
    %587 = vmatprep.subr.bf16.mxu0 %v474
    %588 = vmatpush1.bf16.msra.mxu0 %v473
    %589 = vmatprep.subr.bf16.mxu0 %v478
    %590 = vmatpush1.bf16.msra.mxu0 %v477
    %591 = vmatprep.subr.bf16.mxu0 %v482
    %592 = vmatpush1.bf16.msra.mxu0 %v481
    %593 = vmatprep.subr.bf16.mxu0 %v486
    %594 = vmatpush1.bf16.msra.mxu0 %v485
    %595 = vmatprep.subr.bf16.mxu0 %v490
    %596 = vmatpush1.bf16.msra.mxu0 %v489
    %597 = vmatprep.subr.bf16.mxu0 %v494
    %598 = vmatpush1.bf16.msra.mxu0 %v493
    %599 = vmatprep.subr.bf16.mxu0 %v498
    %600 = vmatpush1.bf16.msra.mxu0 %v497
    %601 = vmatprep.subr.bf16.mxu0 %v502
    %602 = vmatpush1.bf16.msra.mxu0 %v501
    %603 = vmatprep.subr.bf16.mxu0 %v506
    %604 = vmatpush1.bf16.msra.mxu0 %v505
    %605 = vmatprep.subr.bf16.mxu0 %v510
    %606 = vmatpush1.bf16.msra.mxu0 %v509
    %607 = vmatprep.mubr.bf16.mxu0 %v446
    %608 = vmatmul.mubr.bf16.gmra.mrb[0].mxu0 %v445
    %v609 = vpop.f32.mrb[0].mxu0
    %v610 = vadd.f32 %v525, %v609
    %v611 = vpop.f32.mrb[0].mxu0
    %v612 = vadd.f32 %v529, %v611
    %v613 = vpop.f32.mrb[0].mxu0
    %v614 = vpop.f32.mrb[0].mxu0
    %615 = vdwg.mxu0
    %vm616 = vcmp.ge.f32.partialorder %v569, 0.0
    %vm617 = vcmp.ge.f32.partialorder %v571, 0.0
    %vm618 = vcmp.ge.f32.partialorder %v610, 0.0
    %vm619 = vcmp.ge.f32.partialorder %v612, 0.0
    %v620 = vmul.f32 %v569, 0.01
    %v621 = vmul.f32 %v571, 0.01
    %v622 = vmul.f32 %v610, 0.01
    %v623 = vmul.f32 %v612, 0.01
    %v624 = vsel %vm616, %v569, %v620
    %v625 = vsel %vm617, %v571, %v621
    %v626 = vsel %vm618, %v610, %v622
    %v627 = vsel %vm619, %v612, %v623
    %s628 = scalar_lea.vmem [#allocation11], 4
    %v629 = vld [vmem:[%s628] ss:$8 sm:$0xf]
    %s630 = scalar_lea.vmem [#allocation11], 5
    %v631 = vld [vmem:[%s630] ss:$8 sm:$0xf]
    %v632 = vrot.slane %v624, 4
    %v633 = vadd.f32 %v624, %v632
    %v634 = vrot.slane %v633, 2
    %v635 = vadd.f32 %v633, %v634
    %v636 = vrot.slane %v635, 1
    %v637 = vadd.f32 %v635, %v636
    %v638 = vrot.slane %v625, 4
    %v639 = vadd.f32 %v625, %v638
    %v640 = vrot.slane %v639, 2
    %v641 = vadd.f32 %v639, %v640
    %v642 = vrot.slane %v641, 1
    %v643 = vadd.f32 %v641, %v642
    %v644 = vrot.slane %v626, 4
    %v645 = vadd.f32 %v626, %v644
    %v646 = vrot.slane %v645, 2
    %v647 = vadd.f32 %v645, %v646
    %v648 = vrot.slane %v647, 1
    %v649 = vadd.f32 %v647, %v648
    %v650 = vrot.slane %v627, 4
    %v651 = vadd.f32 %v627, %v650
    %v652 = vrot.slane %v651, 2
    %v653 = vadd.f32 %v651, %v652
    %v654 = vrot.slane %v653, 1
    %v655 = vadd.f32 %v653, %v654
    %v656 = vmul.f32 %v637, %v350
    %v657 = vmul.f32 %v643, %v350
    %v658 = vmul.f32 %v649, %v350
    %v659 = vmul.f32 %v655, %v350
    %v660 = vsub.f32 %v624, %v656
    %v661 = vsub.f32 %v625, %v657
    %v662 = vsub.f32 %v626, %v658
    %v663 = vsub.f32 %v627, %v659
    %v664 = vmul.f32 %v660, %v660
    %v665 = vmul.f32 %v661, %v661
    %v666 = vmul.f32 %v662, %v662
    %v667 = vmul.f32 %v663, %v663
    %v668 = vrot.slane %v664, 4
    %v669 = vadd.f32 %v664, %v668
    %v670 = vrot.slane %v669, 2
    %v671 = vadd.f32 %v669, %v670
    %v672 = vrot.slane %v671, 1
    %v673 = vadd.f32 %v671, %v672
    %v674 = vrot.slane %v665, 4
    %v675 = vadd.f32 %v665, %v674
    %v676 = vrot.slane %v675, 2
    %v677 = vadd.f32 %v675, %v676
    %v678 = vrot.slane %v677, 1
    %v679 = vadd.f32 %v677, %v678
    %v680 = vrot.slane %v666, 4
    %v681 = vadd.f32 %v666, %v680
    %v682 = vrot.slane %v681, 2
    %v683 = vadd.f32 %v681, %v682
    %v684 = vrot.slane %v683, 1
    %v685 = vadd.f32 %v683, %v684
    %v686 = vrot.slane %v667, 4
    %v687 = vadd.f32 %v667, %v686
    %v688 = vrot.slane %v687, 2
    %v689 = vadd.f32 %v687, %v688
    %v690 = vrot.slane %v689, 1
    %v691 = vadd.f32 %v689, %v690
    %v692 = vmul.f32 %v673, %v350
    %v693 = vmul.f32 %v679, %v350
    %v694 = vmul.f32 %v685, %v350
    %v695 = vmul.f32 %v691, %v350
    %v696 = vadd.f32 %v692, 1e-05
    %v697 = vadd.f32 %v693, 1e-05
    %v698 = vadd.f32 %v694, 1e-05
    %v699 = vadd.f32 %v695, 1e-05
    %v700 = vrsqrt.pop %v696
    %v701 = vrsqrt.pop %v697
    %v702 = vrsqrt.pop %v698
    %v703 = vrsqrt.pop %v699
    %v708 = vcombine.low %v700, %v701
    %v709 = vcombine.low %v702, %v703
    %v711 = vunpack.c.l.s4 1966171168
    %v712 = vunpack.c.0.s8 %v711
    %v713 = vlaneseq
    %v714 = vshrl.u32 %v713, 7
    %v715 = vsub.s32 %v712, %v714
    %v716 = vrot.slane %v708, %v715
    %v718 = vunpack.c.l.s4 1966171168
    %v719 = vunpack.c.0.s8 %v718
    %v720 = vlaneseq
    %v721 = vshrl.u32 %v720, 7
    %v722 = vsub.s32 %v719, %v721
    %v723 = vrot.slane %v709, %v722
    %v724 = vcombine.low %v716, %v723
    %v726 = vunpack.c.l.s4 1966171168
    %v727 = vunpack.c.0.s8 %v726
    %v728 = vlaneseq
    %v729 = vshrl.u32 %v728, 7
    %v730 = vsub.s32 %v727, %v729
    %v731 = vrot.slane %v724, %v730
    %v733 = vmul.f32 %v629, %v731
    %v735 = vlaneseq
    %v736 = vshrl.u32 %v735, 7
    %v737 = vsub.s32 0, %v736
    %v738 = vrot.slane %v733, %v737
    %v739 = vlaneseq
    %v740 = vshrl.u32 %v739, 7
    %v741 = vsub.s32 1, %v740
    %v742 = vrot.slane %v733, %v741
    %v743 = vlaneseq
    %v744 = vshrl.u32 %v743, 7
    %v745 = vsub.s32 2, %v744
    %v746 = vrot.slane %v733, %v745
    %v747 = vlaneseq
    %v748 = vshrl.u32 %v747, 7
    %v749 = vsub.s32 3, %v748
    %v750 = vrot.slane %v733, %v749
    %v755 = vmul.f32 %v656, %v738
    %v756 = vmul.f32 %v657, %v742
    %v757 = vmul.f32 %v658, %v746
    %v758 = vmul.f32 %v659, %v750
    %v763 = vcombine.low %v755, %v756
    %v764 = vcombine.low %v757, %v758
    %v766 = vunpack.c.l.s4 1966171168
    %v767 = vunpack.c.0.s8 %v766
    %v768 = vlaneseq
    %v769 = vshrl.u32 %v768, 7
    %v770 = vsub.s32 %v767, %v769
    %v771 = vrot.slane %v763, %v770
    %v773 = vunpack.c.l.s4 1966171168
    %v774 = vunpack.c.0.s8 %v773
    %v775 = vlaneseq
    %v776 = vshrl.u32 %v775, 7
    %v777 = vsub.s32 %v774, %v776
    %v778 = vrot.slane %v764, %v777
    %v779 = vcombine.low %v771, %v778
    %v781 = vunpack.c.l.s4 1966171168
    %v782 = vunpack.c.0.s8 %v781
    %v783 = vlaneseq
    %v784 = vshrl.u32 %v783, 7
    %v785 = vsub.s32 %v782, %v784
    %v786 = vrot.slane %v779, %v785
    %v788 = vsub.f32 %v631, %v786
    %v789 = vmul.f32 %v624, %v738
    %v790 = vmul.f32 %v625, %v742
    %v791 = vmul.f32 %v626, %v746
    %v792 = vmul.f32 %v627, %v750
    %v794 = vlaneseq
    %v795 = vshrl.u32 %v794, 7
    %v796 = vsub.s32 0, %v795
    %v797 = vrot.slane %v788, %v796
    %v798 = vlaneseq
    %v799 = vshrl.u32 %v798, 7
    %v800 = vsub.s32 1, %v799
    %v801 = vrot.slane %v788, %v800
    %v802 = vlaneseq
    %v803 = vshrl.u32 %v802, 7
    %v804 = vsub.s32 2, %v803
    %v805 = vrot.slane %v788, %v804
    %v806 = vlaneseq
    %v807 = vshrl.u32 %v806, 7
    %v808 = vsub.s32 3, %v807
    %v809 = vrot.slane %v788, %v808
    %v814 = vadd.f32 %v789, %v797
    %v815 = vadd.f32 %v790, %v801
    %v816 = vadd.f32 %v791, %v805
    %v817 = vadd.f32 %v792, %v809
    %v818 = vpack.c.bf16 %v814, %v814
    %v819 = vpack.c.bf16 %v815, %v815
    %v820 = vpack.c.bf16 %v816, %v816
    %v821 = vpack.c.bf16 %v817, %v817
    %s822 = smul.u32 %s441, 7
    %s823 = sshll.u32 %s822, 4
    %824 = dma.done %s93, %s823
    %v825 = vld [vmem:[#allocation3] sm:$0xff]
    %v826 = vld [vmem:[#allocation3 + $0x8] sm:$0xff]
    %v827 = vld [vmem:[#allocation3 + $0x10] sm:$0xff]
    %v828 = vld [vmem:[#allocation3 + $0x18] sm:$0xff]
    %v829 = vld [vmem:[#allocation3 + $0x20] sm:$0xff]
    %v830 = vld [vmem:[#allocation3 + $0x28] sm:$0xff]
    %v831 = vld [vmem:[#allocation3 + $0x30] sm:$0xff]
    %v832 = vld [vmem:[#allocation3 + $0x38] sm:$0xff]
    %v833 = vld [vmem:[#allocation3 + $0x40] sm:$0xff]
    %v834 = vld [vmem:[#allocation3 + $0x48] sm:$0xff]
    %v835 = vld [vmem:[#allocation3 + $0x50] sm:$0xff]
    %v836 = vld [vmem:[#allocation3 + $0x58] sm:$0xff]
    %v837 = vld [vmem:[#allocation3 + $0x60] sm:$0xff]
    %v838 = vld [vmem:[#allocation3 + $0x68] sm:$0xff]
    %v839 = vld [vmem:[#allocation3 + $0x70] sm:$0xff]
    %v840 = vld [vmem:[#allocation3 + $0x78] sm:$0xff]
    %v841 = vld [vmem:[#allocation3 + $0x80] sm:$0xff]
    %v842 = vld [vmem:[#allocation3 + $0x88] sm:$0xff]
    %v843 = vld [vmem:[#allocation3 + $0x90] sm:$0xff]
    %v844 = vld [vmem:[#allocation3 + $0x98] sm:$0xff]
    %v845 = vld [vmem:[#allocation3 + $0xa0] sm:$0xff]
    %v846 = vld [vmem:[#allocation3 + $0xa8] sm:$0xff]
    %v847 = vld [vmem:[#allocation3 + $0xb0] sm:$0xff]
    %v848 = vld [vmem:[#allocation3 + $0xb8] sm:$0xff]
    %v849 = vld [vmem:[#allocation3 + $0xc0] sm:$0xff]
    %v850 = vld [vmem:[#allocation3 + $0xc8] sm:$0xff]
    %v851 = vld [vmem:[#allocation3 + $0xd0] sm:$0xff]
    %v852 = vld [vmem:[#allocation3 + $0xd8] sm:$0xff]
    %v853 = vld [vmem:[#allocation3 + $0xe0] sm:$0xff]
    %v854 = vld [vmem:[#allocation3 + $0xe8] sm:$0xff]
    %v855 = vld [vmem:[#allocation3 + $0xf0] sm:$0xff]
    %v856 = vld [vmem:[#allocation3 + $0xf8] sm:$0xff]
    %v857 = vld [vmem:[#allocation3 + $0x100] sm:$0xff]
    %v858 = vld [vmem:[#allocation3 + $0x108] sm:$0xff]
    %v859 = vld [vmem:[#allocation3 + $0x110] sm:$0xff]
    %v860 = vld [vmem:[#allocation3 + $0x118] sm:$0xff]
    %v861 = vld [vmem:[#allocation3 + $0x120] sm:$0xff]
    %v862 = vld [vmem:[#allocation3 + $0x128] sm:$0xff]
    %v863 = vld [vmem:[#allocation3 + $0x130] sm:$0xff]
    %v864 = vld [vmem:[#allocation3 + $0x138] sm:$0xff]
    %v865 = vld [vmem:[#allocation3 + $0x140] sm:$0xff]
    %v866 = vld [vmem:[#allocation3 + $0x148] sm:$0xff]
    %v867 = vld [vmem:[#allocation3 + $0x150] sm:$0xff]
    %v868 = vld [vmem:[#allocation3 + $0x158] sm:$0xff]
    %v869 = vld [vmem:[#allocation3 + $0x160] sm:$0xff]
    %v870 = vld [vmem:[#allocation3 + $0x168] sm:$0xff]
    %v871 = vld [vmem:[#allocation3 + $0x170] sm:$0xff]
    %v872 = vld [vmem:[#allocation3 + $0x178] sm:$0xff]
    %v873 = vld [vmem:[#allocation3 + $0x180] sm:$0xff]
    %v874 = vld [vmem:[#allocation3 + $0x188] sm:$0xff]
    %v875 = vld [vmem:[#allocation3 + $0x190] sm:$0xff]
    %v876 = vld [vmem:[#allocation3 + $0x198] sm:$0xff]
    %v877 = vld [vmem:[#allocation3 + $0x1a0] sm:$0xff]
    %v878 = vld [vmem:[#allocation3 + $0x1a8] sm:$0xff]
    %v879 = vld [vmem:[#allocation3 + $0x1b0] sm:$0xff]
    %v880 = vld [vmem:[#allocation3 + $0x1b8] sm:$0xff]
    %v881 = vld [vmem:[#allocation3 + $0x1c0] sm:$0xff]
    %v882 = vld [vmem:[#allocation3 + $0x1c8] sm:$0xff]
    %v883 = vld [vmem:[#allocation3 + $0x1d0] sm:$0xff]
    %v884 = vld [vmem:[#allocation3 + $0x1d8] sm:$0xff]
    %v885 = vld [vmem:[#allocation3 + $0x1e0] sm:$0xff]
    %v886 = vld [vmem:[#allocation3 + $0x1e8] sm:$0xff]
    %v887 = vld [vmem:[#allocation3 + $0x1f0] sm:$0xff]
    %v888 = vld [vmem:[#allocation3 + $0x1f8] sm:$0xff]
    %v889 = vld [vmem:[#allocation3 + $0x200] sm:$0xff]
    %v890 = vld [vmem:[#allocation3 + $0x208] sm:$0xff]
    %v891 = vld [vmem:[#allocation3 + $0x210] sm:$0xff]
    %v892 = vld [vmem:[#allocation3 + $0x218] sm:$0xff]
    %v893 = vld [vmem:[#allocation3 + $0x220] sm:$0xff]
    %v894 = vld [vmem:[#allocation3 + $0x228] sm:$0xff]
    %v895 = vld [vmem:[#allocation3 + $0x230] sm:$0xff]
    %v896 = vld [vmem:[#allocation3 + $0x238] sm:$0xff]
    %v897 = vld [vmem:[#allocation3 + $0x240] sm:$0xff]
    %v898 = vld [vmem:[#allocation3 + $0x248] sm:$0xff]
    %v899 = vld [vmem:[#allocation3 + $0x250] sm:$0xff]
    %v900 = vld [vmem:[#allocation3 + $0x258] sm:$0xff]
    %v901 = vld [vmem:[#allocation3 + $0x260] sm:$0xff]
    %v902 = vld [vmem:[#allocation3 + $0x268] sm:$0xff]
    %v903 = vld [vmem:[#allocation3 + $0x270] sm:$0xff]
    %v904 = vld [vmem:[#allocation3 + $0x278] sm:$0xff]
    %v905 = vld [vmem:[#allocation3 + $0x280] sm:$0xff]
    %v906 = vld [vmem:[#allocation3 + $0x288] sm:$0xff]
    %v907 = vld [vmem:[#allocation3 + $0x290] sm:$0xff]
    %v908 = vld [vmem:[#allocation3 + $0x298] sm:$0xff]
    %v909 = vld [vmem:[#allocation3 + $0x2a0] sm:$0xff]
    %v910 = vld [vmem:[#allocation3 + $0x2a8] sm:$0xff]
    %v911 = vld [vmem:[#allocation3 + $0x2b0] sm:$0xff]
    %v912 = vld [vmem:[#allocation3 + $0x2b8] sm:$0xff]
    %v913 = vld [vmem:[#allocation3 + $0x2c0] sm:$0xff]
    %v914 = vld [vmem:[#allocation3 + $0x2c8] sm:$0xff]
    %v915 = vld [vmem:[#allocation3 + $0x2d0] sm:$0xff]
    %v916 = vld [vmem:[#allocation3 + $0x2d8] sm:$0xff]
    %v917 = vld [vmem:[#allocation3 + $0x2e0] sm:$0xff]
    %v918 = vld [vmem:[#allocation3 + $0x2e8] sm:$0xff]
    %v919 = vld [vmem:[#allocation3 + $0x2f0] sm:$0xff]
    %v920 = vld [vmem:[#allocation3 + $0x2f8] sm:$0xff]
    %v921 = vld [vmem:[#allocation3 + $0x300] sm:$0xff]
    %v922 = vld [vmem:[#allocation3 + $0x308] sm:$0xff]
    %v923 = vld [vmem:[#allocation3 + $0x310] sm:$0xff]
    %v924 = vld [vmem:[#allocation3 + $0x318] sm:$0xff]
    %v925 = vld [vmem:[#allocation3 + $0x320] sm:$0xff]
    %v926 = vld [vmem:[#allocation3 + $0x328] sm:$0xff]
    %v927 = vld [vmem:[#allocation3 + $0x330] sm:$0xff]
    %v928 = vld [vmem:[#allocation3 + $0x338] sm:$0xff]
    %v929 = vld [vmem:[#allocation3 + $0x340] sm:$0xff]
    %v930 = vld [vmem:[#allocation3 + $0x348] sm:$0xff]
    %v931 = vld [vmem:[#allocation3 + $0x350] sm:$0xff]
    %v932 = vld [vmem:[#allocation3 + $0x358] sm:$0xff]
    %v933 = vld [vmem:[#allocation3 + $0x360] sm:$0xff]
    %v934 = vld [vmem:[#allocation3 + $0x368] sm:$0xff]
    %v935 = vld [vmem:[#allocation3 + $0x370] sm:$0xff]
    %v936 = vld [vmem:[#allocation3 + $0x378] sm:$0xff]
    %s937 = sshll.u32 %s822, 4
    %938 = dma.done %s130, %s937
    %v939 = vld [vmem:[#allocation3 + $0x380] sm:$0xff]
    %v940 = vld [vmem:[#allocation3 + $0x388] sm:$0xff]
    %v941 = vld [vmem:[#allocation3 + $0x390] sm:$0xff]
    %v942 = vld [vmem:[#allocation3 + $0x398] sm:$0xff]
    %v943 = vld [vmem:[#allocation3 + $0x3a0] sm:$0xff]
    %v944 = vld [vmem:[#allocation3 + $0x3a8] sm:$0xff]
    %v945 = vld [vmem:[#allocation3 + $0x3b0] sm:$0xff]
    %v946 = vld [vmem:[#allocation3 + $0x3b8] sm:$0xff]
    %v947 = vld [vmem:[#allocation3 + $0x3c0] sm:$0xff]
    %v948 = vld [vmem:[#allocation3 + $0x3c8] sm:$0xff]
    %v949 = vld [vmem:[#allocation3 + $0x3d0] sm:$0xff]
    %v950 = vld [vmem:[#allocation3 + $0x3d8] sm:$0xff]
    %v951 = vld [vmem:[#allocation3 + $0x3e0] sm:$0xff]
    %v952 = vld [vmem:[#allocation3 + $0x3e8] sm:$0xff]
    %v953 = vld [vmem:[#allocation3 + $0x3f0] sm:$0xff]
    %v954 = vld [vmem:[#allocation3 + $0x3f8] sm:$0xff]
    %v955 = vld [vmem:[#allocation3 + $0x400] sm:$0xff]
    %v956 = vld [vmem:[#allocation3 + $0x408] sm:$0xff]
    %v957 = vld [vmem:[#allocation3 + $0x410] sm:$0xff]
    %v958 = vld [vmem:[#allocation3 + $0x418] sm:$0xff]
    %v959 = vld [vmem:[#allocation3 + $0x420] sm:$0xff]
    %v960 = vld [vmem:[#allocation3 + $0x428] sm:$0xff]
    %v961 = vld [vmem:[#allocation3 + $0x430] sm:$0xff]
    %v962 = vld [vmem:[#allocation3 + $0x438] sm:$0xff]
    %v963 = vld [vmem:[#allocation3 + $0x440] sm:$0xff]
    %v964 = vld [vmem:[#allocation3 + $0x448] sm:$0xff]
    %v965 = vld [vmem:[#allocation3 + $0x450] sm:$0xff]
    %v966 = vld [vmem:[#allocation3 + $0x458] sm:$0xff]
    %v967 = vld [vmem:[#allocation3 + $0x460] sm:$0xff]
    %v968 = vld [vmem:[#allocation3 + $0x468] sm:$0xff]
    %v969 = vld [vmem:[#allocation3 + $0x470] sm:$0xff]
    %v970 = vld [vmem:[#allocation3 + $0x478] sm:$0xff]
    %v971 = vld [vmem:[#allocation3 + $0x480] sm:$0xff]
    %v972 = vld [vmem:[#allocation3 + $0x488] sm:$0xff]
    %v973 = vld [vmem:[#allocation3 + $0x490] sm:$0xff]
    %v974 = vld [vmem:[#allocation3 + $0x498] sm:$0xff]
    %v975 = vld [vmem:[#allocation3 + $0x4a0] sm:$0xff]
    %v976 = vld [vmem:[#allocation3 + $0x4a8] sm:$0xff]
    %v977 = vld [vmem:[#allocation3 + $0x4b0] sm:$0xff]
    %v978 = vld [vmem:[#allocation3 + $0x4b8] sm:$0xff]
    %v979 = vld [vmem:[#allocation3 + $0x4c0] sm:$0xff]
    %v980 = vld [vmem:[#allocation3 + $0x4c8] sm:$0xff]
    %v981 = vld [vmem:[#allocation3 + $0x4d0] sm:$0xff]
    %v982 = vld [vmem:[#allocation3 + $0x4d8] sm:$0xff]
    %v983 = vld [vmem:[#allocation3 + $0x4e0] sm:$0xff]
    %v984 = vld [vmem:[#allocation3 + $0x4e8] sm:$0xff]
    %v985 = vld [vmem:[#allocation3 + $0x4f0] sm:$0xff]
    %v986 = vld [vmem:[#allocation3 + $0x4f8] sm:$0xff]
    %v987 = vld [vmem:[#allocation3 + $0x500] sm:$0xff]
    %v988 = vld [vmem:[#allocation3 + $0x508] sm:$0xff]
    %v989 = vld [vmem:[#allocation3 + $0x510] sm:$0xff]
    %v990 = vld [vmem:[#allocation3 + $0x518] sm:$0xff]
    %v991 = vld [vmem:[#allocation3 + $0x520] sm:$0xff]
    %v992 = vld [vmem:[#allocation3 + $0x528] sm:$0xff]
    %v993 = vld [vmem:[#allocation3 + $0x530] sm:$0xff]
    %v994 = vld [vmem:[#allocation3 + $0x538] sm:$0xff]
    %v995 = vld [vmem:[#allocation3 + $0x540] sm:$0xff]
    %v996 = vld [vmem:[#allocation3 + $0x548] sm:$0xff]
    %v997 = vld [vmem:[#allocation3 + $0x550] sm:$0xff]
    %v998 = vld [vmem:[#allocation3 + $0x558] sm:$0xff]
    %v999 = vld [vmem:[#allocation3 + $0x560] sm:$0xff]
    %v1000 = vld [vmem:[#allocation3 + $0x568] sm:$0xff]
    %v1001 = vld [vmem:[#allocation3 + $0x570] sm:$0xff]
    %v1002 = vld [vmem:[#allocation3 + $0x578] sm:$0xff]
    %v1003 = vld [vmem:[#allocation3 + $0x580] sm:$0xff]
    %v1004 = vld [vmem:[#allocation3 + $0x588] sm:$0xff]
    %v1005 = vld [vmem:[#allocation3 + $0x590] sm:$0xff]
    %v1006 = vld [vmem:[#allocation3 + $0x598] sm:$0xff]
    %v1007 = vld [vmem:[#allocation3 + $0x5a0] sm:$0xff]
    %v1008 = vld [vmem:[#allocation3 + $0x5a8] sm:$0xff]
    %v1009 = vld [vmem:[#allocation3 + $0x5b0] sm:$0xff]
    %v1010 = vld [vmem:[#allocation3 + $0x5b8] sm:$0xff]
    %v1011 = vld [vmem:[#allocation3 + $0x5c0] sm:$0xff]
    %v1012 = vld [vmem:[#allocation3 + $0x5c8] sm:$0xff]
    %v1013 = vld [vmem:[#allocation3 + $0x5d0] sm:$0xff]
    %v1014 = vld [vmem:[#allocation3 + $0x5d8] sm:$0xff]
    %v1015 = vld [vmem:[#allocation3 + $0x5e0] sm:$0xff]
    %v1016 = vld [vmem:[#allocation3 + $0x5e8] sm:$0xff]
    %v1017 = vld [vmem:[#allocation3 + $0x5f0] sm:$0xff]
    %v1018 = vld [vmem:[#allocation3 + $0x5f8] sm:$0xff]
    %v1019 = vld [vmem:[#allocation3 + $0x600] sm:$0xff]
    %v1020 = vld [vmem:[#allocation3 + $0x608] sm:$0xff]
    %v1021 = vld [vmem:[#allocation3 + $0x610] sm:$0xff]
    %v1022 = vld [vmem:[#allocation3 + $0x618] sm:$0xff]
    %v1023 = vld [vmem:[#allocation3 + $0x620] sm:$0xff]
    %v1024 = vld [vmem:[#allocation3 + $0x628] sm:$0xff]
    %v1025 = vld [vmem:[#allocation3 + $0x630] sm:$0xff]
    %v1026 = vld [vmem:[#allocation3 + $0x638] sm:$0xff]
    %v1027 = vld [vmem:[#allocation3 + $0x640] sm:$0xff]
    %v1028 = vld [vmem:[#allocation3 + $0x648] sm:$0xff]
    %v1029 = vld [vmem:[#allocation3 + $0x650] sm:$0xff]
    %v1030 = vld [vmem:[#allocation3 + $0x658] sm:$0xff]
    %v1031 = vld [vmem:[#allocation3 + $0x660] sm:$0xff]
    %v1032 = vld [vmem:[#allocation3 + $0x668] sm:$0xff]
    %v1033 = vld [vmem:[#allocation3 + $0x670] sm:$0xff]
    %v1034 = vld [vmem:[#allocation3 + $0x678] sm:$0xff]
    %v1035 = vld [vmem:[#allocation3 + $0x680] sm:$0xff]
    %v1036 = vld [vmem:[#allocation3 + $0x688] sm:$0xff]
    %v1037 = vld [vmem:[#allocation3 + $0x690] sm:$0xff]
    %v1038 = vld [vmem:[#allocation3 + $0x698] sm:$0xff]
    %v1039 = vld [vmem:[#allocation3 + $0x6a0] sm:$0xff]
    %v1040 = vld [vmem:[#allocation3 + $0x6a8] sm:$0xff]
    %v1041 = vld [vmem:[#allocation3 + $0x6b0] sm:$0xff]
    %v1042 = vld [vmem:[#allocation3 + $0x6b8] sm:$0xff]
    %v1043 = vld [vmem:[#allocation3 + $0x6c0] sm:$0xff]
    %v1044 = vld [vmem:[#allocation3 + $0x6c8] sm:$0xff]
    %v1045 = vld [vmem:[#allocation3 + $0x6d0] sm:$0xff]
    %v1046 = vld [vmem:[#allocation3 + $0x6d8] sm:$0xff]
    %v1047 = vld [vmem:[#allocation3 + $0x6e0] sm:$0xff]
    %v1048 = vld [vmem:[#allocation3 + $0x6e8] sm:$0xff]
    %v1049 = vld [vmem:[#allocation3 + $0x6f0] sm:$0xff]
    %v1050 = vld [vmem:[#allocation3 + $0x6f8] sm:$0xff]
    %1051 = vmatprep.subr.bf16.mxu0 %v940
    %1052 = vmatpush1.bf16.msra.mxu0 %v939
    %1053 = vmatprep.subr.bf16.mxu0 %v947
    %1054 = vmatpush1.bf16.msra.mxu0 %v946
    %1055 = vmatprep.subr.bf16.mxu0 %v954
    %1056 = vmatpush1.bf16.msra.mxu0 %v953
    %1057 = vmatprep.subr.bf16.mxu0 %v961
    %1058 = vmatpush1.bf16.msra.mxu0 %v960
    %1059 = vmatprep.subr.bf16.mxu0 %v968
    %1060 = vmatpush1.bf16.msra.mxu0 %v967
    %1061 = vmatprep.subr.bf16.mxu0 %v975
    %1062 = vmatpush1.bf16.msra.mxu0 %v974
    %1063 = vmatprep.subr.bf16.mxu0 %v982
    %1064 = vmatpush1.bf16.msra.mxu0 %v981
    %1065 = vmatprep.subr.bf16.mxu0 %v989
    %1066 = vmatpush1.bf16.msra.mxu0 %v988
    %1067 = vmatprep.subr.bf16.mxu0 %v996
    %1068 = vmatpush1.bf16.msra.mxu0 %v995
    %1069 = vmatprep.subr.bf16.mxu0 %v1003
    %1070 = vmatpush1.bf16.msra.mxu0 %v1002
    %1071 = vmatprep.subr.bf16.mxu0 %v1010
    %1072 = vmatpush1.bf16.msra.mxu0 %v1009
    %1073 = vmatprep.subr.bf16.mxu0 %v1017
    %1074 = vmatpush1.bf16.msra.mxu0 %v1016
    %1075 = vmatprep.subr.bf16.mxu0 %v1024
    %1076 = vmatpush1.bf16.msra.mxu0 %v1023
    %1077 = vmatprep.subr.bf16.mxu0 %v1031
    %1078 = vmatpush1.bf16.msra.mxu0 %v1030
    %1079 = vmatprep.subr.bf16.mxu0 %v1038
    %1080 = vmatpush1.bf16.msra.mxu0 %v1037
    %1081 = vmatprep.subr.bf16.mxu0 %v1045
    %1082 = vmatpush1.bf16.msra.mxu0 %v1044
    %1083 = vmatprep.mubr.bf16.mxu0 %v821
    %1084 = vmatmul.mubr.bf16.gmra.mrb[0].mxu0 %v820
    %v1085 = vpop.f32.mrb[0].mxu0
    %v1086 = vadd.f32 0.0, %v1085
    %v1087 = vpop.f32.mrb[0].mxu0
    %v1088 = vadd.f32 0.0, %v1087
    %v1089 = vpop.f32.mrb[0].mxu0
    %v1090 = vpop.f32.mrb[0].mxu0
    %1091 = vdwg.mxu0
    %1092 = vmatprep.subr.bf16.mxu0 %v942
    %1093 = vmatpush1.bf16.msra.mxu0 %v941
    %1094 = vmatprep.subr.bf16.mxu0 %v949
    %1095 = vmatpush1.bf16.msra.mxu0 %v948
    %1096 = vmatprep.subr.bf16.mxu0 %v956
    %1097 = vmatpush1.bf16.msra.mxu0 %v955
    %1098 = vmatprep.subr.bf16.mxu0 %v963
    %1099 = vmatpush1.bf16.msra.mxu0 %v962
    %1100 = vmatprep.subr.bf16.mxu0 %v970
    %1101 = vmatpush1.bf16.msra.mxu0 %v969
    %1102 = vmatprep.subr.bf16.mxu0 %v977
    %1103 = vmatpush1.bf16.msra.mxu0 %v976
    %1104 = vmatprep.subr.bf16.mxu0 %v984
    %1105 = vmatpush1.bf16.msra.mxu0 %v983
    %1106 = vmatprep.subr.bf16.mxu0 %v991
    %1107 = vmatpush1.bf16.msra.mxu0 %v990
    %1108 = vmatprep.subr.bf16.mxu0 %v998
    %1109 = vmatpush1.bf16.msra.mxu0 %v997
    %1110 = vmatprep.subr.bf16.mxu0 %v1005
    %1111 = vmatpush1.bf16.msra.mxu0 %v1004
    %1112 = vmatprep.subr.bf16.mxu0 %v1012
    %1113 = vmatpush1.bf16.msra.mxu0 %v1011
    %1114 = vmatprep.subr.bf16.mxu0 %v1019
    %1115 = vmatpush1.bf16.msra.mxu0 %v1018
    %1116 = vmatprep.subr.bf16.mxu0 %v1026
    %1117 = vmatpush1.bf16.msra.mxu0 %v1025
    %1118 = vmatprep.subr.bf16.mxu0 %v1033
    %1119 = vmatpush1.bf16.msra.mxu0 %v1032
    %1120 = vmatprep.subr.bf16.mxu0 %v1040
    %1121 = vmatpush1.bf16.msra.mxu0 %v1039
    %1122 = vmatprep.subr.bf16.mxu0 %v1047
    %1123 = vmatpush1.bf16.msra.mxu0 %v1046
    %1124 = vmatprep.mubr.bf16.mxu0 %v821
    %1125 = vmatmul.mubr.bf16.gmra.mrb[0].mxu0 %v820
    %v1126 = vpop.f32.mrb[0].mxu0
    %v1127 = vadd.f32 0.0, %v1126
    %v1128 = vpop.f32.mrb[0].mxu0
    %v1129 = vadd.f32 0.0, %v1128
    %v1130 = vpop.f32.mrb[0].mxu0
    %v1131 = vpop.f32.mrb[0].mxu0
    %1132 = vdwg.mxu0
    %1133 = vmatprep.subr.bf16.mxu0 %v944
    %1134 = vmatpush1.bf16.msra.mxu0 %v943
    %1135 = vmatprep.subr.bf16.mxu0 %v951
    %1136 = vmatpush1.bf16.msra.mxu0 %v950
    %1137 = vmatprep.subr.bf16.mxu0 %v958
    %1138 = vmatpush1.bf16.msra.mxu0 %v957
    %1139 = vmatprep.subr.bf16.mxu0 %v965
    %1140 = vmatpush1.bf16.msra.mxu0 %v964
    %1141 = vmatprep.subr.bf16.mxu0 %v972
    %1142 = vmatpush1.bf16.msra.mxu0 %v971
    %1143 = vmatprep.subr.bf16.mxu0 %v979
    %1144 = vmatpush1.bf16.msra.mxu0 %v978
    %1145 = vmatprep.subr.bf16.mxu0 %v986
    %1146 = vmatpush1.bf16.msra.mxu0 %v985
    %1147 = vmatprep.subr.bf16.mxu0 %v993
    %1148 = vmatpush1.bf16.msra.mxu0 %v992
    %1149 = vmatprep.subr.bf16.mxu0 %v1000
    %1150 = vmatpush1.bf16.msra.mxu0 %v999
    %1151 = vmatprep.subr.bf16.mxu0 %v1007
    %1152 = vmatpush1.bf16.msra.mxu0 %v1006
    %1153 = vmatprep.subr.bf16.mxu0 %v1014
    %1154 = vmatpush1.bf16.msra.mxu0 %v1013
    %1155 = vmatprep.subr.bf16.mxu0 %v1021
    %1156 = vmatpush1.bf16.msra.mxu0 %v1020
    %1157 = vmatprep.subr.bf16.mxu0 %v1028
    %1158 = vmatpush1.bf16.msra.mxu0 %v1027
    %1159 = vmatprep.subr.bf16.mxu0 %v1035
    %1160 = vmatpush1.bf16.msra.mxu0 %v1034
    %1161 = vmatprep.subr.bf16.mxu0 %v1042
    %1162 = vmatpush1.bf16.msra.mxu0 %v1041
    %1163 = vmatprep.subr.bf16.mxu0 %v1049
    %1164 = vmatpush1.bf16.msra.mxu0 %v1048
    %1165 = vmatprep.mubr.bf16.mxu0 %v821
    %1166 = vmatmul.mubr.bf16.gmra.mrb[0].mxu0 %v820
    %v1167 = vpop.f32.mrb[0].mxu0
    %v1168 = vadd.f32 0.0, %v1167
    %v1169 = vpop.f32.mrb[0].mxu0
    %v1170 = vadd.f32 0.0, %v1169
    %v1171 = vpop.f32.mrb[0].mxu0
    %v1172 = vpop.f32.mrb[0].mxu0
    %1173 = vdwg.mxu0
    %1174 = vmatprep.subr.bf16.mxu0 0
    %1175 = vmatpush1.bf16.msra.mxu0 %v945
    %1176 = vmatprep.subr.bf16.mxu0 0
    %1177 = vmatpush1.bf16.msra.mxu0 %v952
    %1178 = vmatprep.subr.bf16.mxu0 0
    %1179 = vmatpush1.bf16.msra.mxu0 %v959
    %1180 = vmatprep.subr.bf16.mxu0 0
    %1181 = vmatpush1.bf16.msra.mxu0 %v966
    %1182 = vmatprep.subr.bf16.mxu0 0
    %1183 = vmatpush1.bf16.msra.mxu0 %v973
    %1184 = vmatprep.subr.bf16.mxu0 0
    %1185 = vmatpush1.bf16.msra.mxu0 %v980
    %1186 = vmatprep.subr.bf16.mxu0 0
    %1187 = vmatpush1.bf16.msra.mxu0 %v987
    %1188 = vmatprep.subr.bf16.mxu0 0
    %1189 = vmatpush1.bf16.msra.mxu0 %v994
    %1190 = vmatprep.subr.bf16.mxu0 0
    %1191 = vmatpush1.bf16.msra.mxu0 %v1001
    %1192 = vmatprep.subr.bf16.mxu0 0
    %1193 = vmatpush1.bf16.msra.mxu0 %v1008
    %1194 = vmatprep.subr.bf16.mxu0 0
    %1195 = vmatpush1.bf16.msra.mxu0 %v1015
    %1196 = vmatprep.subr.bf16.mxu0 0
    %1197 = vmatpush1.bf16.msra.mxu0 %v1022
    %1198 = vmatprep.subr.bf16.mxu0 0
    %1199 = vmatpush1.bf16.msra.mxu0 %v1029
    %1200 = vmatprep.subr.bf16.mxu0 0
    %1201 = vmatpush1.bf16.msra.mxu0 %v1036
    %1202 = vmatprep.subr.bf16.mxu0 0
    %1203 = vmatpush1.bf16.msra.mxu0 %v1043
    %1204 = vmatprep.subr.bf16.mxu0 0
    %1205 = vmatpush1.bf16.msra.mxu0 %v1050
    %1206 = vmatprep.mubr.bf16.mxu0 %v821
    %1207 = vmatmul.mubr.bf16.gmra.mrb[0].mxu0 %v820
    %v1208 = vpop.f32.mrb[0].mxu0
    %v1209 = vadd.f32 0.0, %v1208
    %v1210 = vpop.f32.mrb[0].mxu0
    %v1211 = vpop.f32.mrb[0].mxu0
    %v1212 = vpop.f32.mrb[0].mxu0
    %1213 = vdwg.mxu0
    %1214 = vmatprep.subr.bf16.mxu0 %v826
    %1215 = vmatpush1.bf16.msra.mxu0 %v825
    %1216 = vmatprep.subr.bf16.mxu0 %v833
    %1217 = vmatpush1.bf16.msra.mxu0 %v832
    %1218 = vmatprep.subr.bf16.mxu0 %v840
    %1219 = vmatpush1.bf16.msra.mxu0 %v839
    %1220 = vmatprep.subr.bf16.mxu0 %v847
    %1221 = vmatpush1.bf16.msra.mxu0 %v846
    %1222 = vmatprep.subr.bf16.mxu0 %v854
    %1223 = vmatpush1.bf16.msra.mxu0 %v853
    %1224 = vmatprep.subr.bf16.mxu0 %v861
    %1225 = vmatpush1.bf16.msra.mxu0 %v860
    %1226 = vmatprep.subr.bf16.mxu0 %v868
    %1227 = vmatpush1.bf16.msra.mxu0 %v867
    %1228 = vmatprep.subr.bf16.mxu0 %v875
    %1229 = vmatpush1.bf16.msra.mxu0 %v874
    %1230 = vmatprep.subr.bf16.mxu0 %v882
    %1231 = vmatpush1.bf16.msra.mxu0 %v881
    %1232 = vmatprep.subr.bf16.mxu0 %v889
    %1233 = vmatpush1.bf16.msra.mxu0 %v888
    %1234 = vmatprep.subr.bf16.mxu0 %v896
    %1235 = vmatpush1.bf16.msra.mxu0 %v895
    %1236 = vmatprep.subr.bf16.mxu0 %v903
    %1237 = vmatpush1.bf16.msra.mxu0 %v902
    %1238 = vmatprep.subr.bf16.mxu0 %v910
    %1239 = vmatpush1.bf16.msra.mxu0 %v909
    %1240 = vmatprep.subr.bf16.mxu0 %v917
    %1241 = vmatpush1.bf16.msra.mxu0 %v916
    %1242 = vmatprep.subr.bf16.mxu0 %v924
    %1243 = vmatpush1.bf16.msra.mxu0 %v923
    %1244 = vmatprep.subr.bf16.mxu0 %v931
    %1245 = vmatpush1.bf16.msra.mxu0 %v930
    %1246 = vmatprep.mubr.bf16.mxu0 %v819
    %1247 = vmatmul.mubr.bf16.gmra.mrb[0].mxu0 %v818
    %v1248 = vpop.f32.mrb[0].mxu0
    %v1249 = vadd.f32 %v1086, %v1248
    %v1250 = vpop.f32.mrb[0].mxu0
    %v1251 = vadd.f32 %v1088, %v1250
    %v1252 = vpop.f32.mrb[0].mxu0
    %v1253 = vpop.f32.mrb[0].mxu0
    %1254 = vdwg.mxu0
    %1255 = vmatprep.subr.bf16.mxu0 %v828
    %1256 = vmatpush1.bf16.msra.mxu0 %v827
    %1257 = vmatprep.subr.bf16.mxu0 %v835
    %1258 = vmatpush1.bf16.msra.mxu0 %v834
    %1259 = vmatprep.subr.bf16.mxu0 %v842
    %1260 = vmatpush1.bf16.msra.mxu0 %v841
    %1261 = vmatprep.subr.bf16.mxu0 %v849
    %1262 = vmatpush1.bf16.msra.mxu0 %v848
    %1263 = vmatprep.subr.bf16.mxu0 %v856
    %1264 = vmatpush1.bf16.msra.mxu0 %v855
    %1265 = vmatprep.subr.bf16.mxu0 %v863
    %1266 = vmatpush1.bf16.msra.mxu0 %v862
    %1267 = vmatprep.subr.bf16.mxu0 %v870
    %1268 = vmatpush1.bf16.msra.mxu0 %v869
    %1269 = vmatprep.subr.bf16.mxu0 %v877
    %1270 = vmatpush1.bf16.msra.mxu0 %v876
    %1271 = vmatprep.subr.bf16.mxu0 %v884
    %1272 = vmatpush1.bf16.msra.mxu0 %v883
    %1273 = vmatprep.subr.bf16.mxu0 %v891
    %1274 = vmatpush1.bf16.msra.mxu0 %v890
    %1275 = vmatprep.subr.bf16.mxu0 %v898
    %1276 = vmatpush1.bf16.msra.mxu0 %v897
    %1277 = vmatprep.subr.bf16.mxu0 %v905
    %1278 = vmatpush1.bf16.msra.mxu0 %v904
    %1279 = vmatprep.subr.bf16.mxu0 %v912
    %1280 = vmatpush1.bf16.msra.mxu0 %v911
    %1281 = vmatprep.subr.bf16.mxu0 %v919
    %1282 = vmatpush1.bf16.msra.mxu0 %v918
    %1283 = vmatprep.subr.bf16.mxu0 %v926
    %1284 = vmatpush1.bf16.msra.mxu0 %v925
    %1285 = vmatprep.subr.bf16.mxu0 %v933
    %1286 = vmatpush1.bf16.msra.mxu0 %v932
    %1287 = vmatprep.mubr.bf16.mxu0 %v819
    %1288 = vmatmul.mubr.bf16.gmra.mrb[0].mxu0 %v818
    %v1289 = vpop.f32.mrb[0].mxu0
    %v1290 = vadd.f32 %v1127, %v1289
    %v1291 = vpop.f32.mrb[0].mxu0
    %v1292 = vadd.f32 %v1129, %v1291
    %v1293 = vpop.f32.mrb[0].mxu0
    %v1294 = vpop.f32.mrb[0].mxu0
    %1295 = vdwg.mxu0
    %1296 = vmatprep.subr.bf16.mxu0 %v830
    %1297 = vmatpush1.bf16.msra.mxu0 %v829
    %1298 = vmatprep.subr.bf16.mxu0 %v837
    %1299 = vmatpush1.bf16.msra.mxu0 %v836
    %1300 = vmatprep.subr.bf16.mxu0 %v844
    %1301 = vmatpush1.bf16.msra.mxu0 %v843
    %1302 = vmatprep.subr.bf16.mxu0 %v851
    %1303 = vmatpush1.bf16.msra.mxu0 %v850
    %1304 = vmatprep.subr.bf16.mxu0 %v858
    %1305 = vmatpush1.bf16.msra.mxu0 %v857
    %1306 = vmatprep.subr.bf16.mxu0 %v865
    %1307 = vmatpush1.bf16.msra.mxu0 %v864
    %1308 = vmatprep.subr.bf16.mxu0 %v872
    %1309 = vmatpush1.bf16.msra.mxu0 %v871
    %1310 = vmatprep.subr.bf16.mxu0 %v879
    %1311 = vmatpush1.bf16.msra.mxu0 %v878
    %1312 = vmatprep.subr.bf16.mxu0 %v886
    %1313 = vmatpush1.bf16.msra.mxu0 %v885
    %1314 = vmatprep.subr.bf16.mxu0 %v893
    %1315 = vmatpush1.bf16.msra.mxu0 %v892
    %1316 = vmatprep.subr.bf16.mxu0 %v900
    %1317 = vmatpush1.bf16.msra.mxu0 %v899
    %1318 = vmatprep.subr.bf16.mxu0 %v907
    %1319 = vmatpush1.bf16.msra.mxu0 %v906
    %1320 = vmatprep.subr.bf16.mxu0 %v914
    %1321 = vmatpush1.bf16.msra.mxu0 %v913
    %1322 = vmatprep.subr.bf16.mxu0 %v921
    %1323 = vmatpush1.bf16.msra.mxu0 %v920
    %1324 = vmatprep.subr.bf16.mxu0 %v928
    %1325 = vmatpush1.bf16.msra.mxu0 %v927
    %1326 = vmatprep.subr.bf16.mxu0 %v935
    %1327 = vmatpush1.bf16.msra.mxu0 %v934
    %1328 = vmatprep.mubr.bf16.mxu0 %v819
    %1329 = vmatmul.mubr.bf16.gmra.mrb[0].mxu0 %v818
    %v1330 = vpop.f32.mrb[0].mxu0
    %v1331 = vadd.f32 %v1168, %v1330
    %v1332 = vpop.f32.mrb[0].mxu0
    %v1333 = vadd.f32 %v1170, %v1332
    %v1334 = vpop.f32.mrb[0].mxu0
    %v1335 = vpop.f32.mrb[0].mxu0
    %1336 = vdwg.mxu0
    %1337 = vmatprep.subr.bf16.mxu0 0
    %1338 = vmatpush1.bf16.msra.mxu0 %v831
    %1339 = vmatprep.subr.bf16.mxu0 0
    %1340 = vmatpush1.bf16.msra.mxu0 %v838
    %1341 = vmatprep.subr.bf16.mxu0 0
    %1342 = vmatpush1.bf16.msra.mxu0 %v845
    %1343 = vmatprep.subr.bf16.mxu0 0
    %1344 = vmatpush1.bf16.msra.mxu0 %v852
    %1345 = vmatprep.subr.bf16.mxu0 0
    %1346 = vmatpush1.bf16.msra.mxu0 %v859
    %1347 = vmatprep.subr.bf16.mxu0 0
    %1348 = vmatpush1.bf16.msra.mxu0 %v866
    %1349 = vmatprep.subr.bf16.mxu0 0
    %1350 = vmatpush1.bf16.msra.mxu0 %v873
    %1351 = vmatprep.subr.bf16.mxu0 0
    %1352 = vmatpush1.bf16.msra.mxu0 %v880
    %1353 = vmatprep.subr.bf16.mxu0 0
    %1354 = vmatpush1.bf16.msra.mxu0 %v887
    %1355 = vmatprep.subr.bf16.mxu0 0
    %1356 = vmatpush1.bf16.msra.mxu0 %v894
    %1357 = vmatprep.subr.bf16.mxu0 0
    %1358 = vmatpush1.bf16.msra.mxu0 %v901
    %1359 = vmatprep.subr.bf16.mxu0 0
    %1360 = vmatpush1.bf16.msra.mxu0 %v908
    %1361 = vmatprep.subr.bf16.mxu0 0
    %1362 = vmatpush1.bf16.msra.mxu0 %v915
    %1363 = vmatprep.subr.bf16.mxu0 0
    %1364 = vmatpush1.bf16.msra.mxu0 %v922
    %1365 = vmatprep.subr.bf16.mxu0 0
    %1366 = vmatpush1.bf16.msra.mxu0 %v929
    %1367 = vmatprep.subr.bf16.mxu0 0
    %1368 = vmatpush1.bf16.msra.mxu0 %v936
    %1369 = vmatprep.mubr.bf16.mxu0 %v819
    %1370 = vmatmul.mubr.bf16.gmra.mrb[0].mxu0 %v818
    %v1371 = vpop.f32.mrb[0].mxu0
    %v1372 = vadd.f32 %v1209, %v1371
    %v1373 = vpop.f32.mrb[0].mxu0
    %v1374 = vpop.f32.mrb[0].mxu0
    %v1375 = vpop.f32.mrb[0].mxu0
    %1376 = vdwg.mxu0
    %s1377 = scalar_lea.vmem [#allocation11], 6
    %v1378 = vld [vmem:[%s1377] ss:$8 sm:$0xf]
    %v1379 = vld [vmem:[%s1377] ss:$8 sm:$0xf0]
    %v1380 = vor.u32 %v1378, %v1379
    %v1382 = vlaneseq
    %v1383 = vshrl.u32 %v1382, 7
    %v1384 = vsub.s32 0, %v1383
    %v1385 = vrot.slane %v1380, %v1384
    %v1386 = vlaneseq
    %v1387 = vshrl.u32 %v1386, 7
    %v1388 = vsub.s32 1, %v1387
    %v1389 = vrot.slane %v1380, %v1388
    %v1390 = vlaneseq
    %v1391 = vshrl.u32 %v1390, 7
    %v1392 = vsub.s32 2, %v1391
    %v1393 = vrot.slane %v1380, %v1392
    %v1394 = vlaneseq
    %v1395 = vshrl.u32 %v1394, 7
    %v1396 = vsub.s32 3, %v1395
    %v1397 = vrot.slane %v1380, %v1396
    %v1398 = vlaneseq
    %v1399 = vshrl.u32 %v1398, 7
    %v1400 = vsub.s32 4, %v1399
    %v1401 = vrot.slane %v1380, %v1400
    %v1402 = vlaneseq
    %v1403 = vshrl.u32 %v1402, 7
    %v1404 = vsub.s32 5, %v1403
    %v1405 = vrot.slane %v1380, %v1404
    %v1406 = vlaneseq
    %v1407 = vshrl.u32 %v1406, 7
    %v1408 = vsub.s32 6, %v1407
    %v1409 = vrot.slane %v1380, %v1408
    %v1417 = vadd.f32 %v1249, %v1385
    %v1418 = vadd.f32 %v1251, %v1389
    %v1419 = vadd.f32 %v1290, %v1393
    %v1420 = vadd.f32 %v1292, %v1397
    %v1421 = vadd.f32 %v1331, %v1401
    %v1422 = vadd.f32 %v1333, %v1405
    %v1423 = vadd.f32 %v1372, %v1409
    %vm1424 = vcmp.ge.f32.partialorder %v1417, 0.0
    %vm1425 = vcmp.ge.f32.partialorder %v1418, 0.0
    %vm1426 = vcmp.ge.f32.partialorder %v1419, 0.0
    %vm1427 = vcmp.ge.f32.partialorder %v1420, 0.0
    %vm1428 = vcmp.ge.f32.partialorder %v1421, 0.0
    %vm1429 = vcmp.ge.f32.partialorder %v1422, 0.0
    %vm1430 = vcmp.ge.f32.partialorder %v1423, 0.0
    %v1431 = vmul.f32 %v1417, 0.01
    %v1432 = vmul.f32 %v1418, 0.01
    %v1433 = vmul.f32 %v1419, 0.01
    %v1434 = vmul.f32 %v1420, 0.01
    %v1435 = vmul.f32 %v1421, 0.01
    %v1436 = vmul.f32 %v1422, 0.01
    %v1437 = vmul.f32 %v1423, 0.01
    %v1438 = vsel %vm1424, %v1417, %v1431
    %v1439 = vsel %vm1425, %v1418, %v1432
    %v1440 = vsel %vm1426, %v1419, %v1433
    %v1441 = vsel %vm1427, %v1420, %v1434
    %v1442 = vsel %vm1428, %v1421, %v1435
    %v1443 = vsel %vm1429, %v1422, %v1436
    %v1444 = vsel %vm1430, %v1423, %v1437
    %s1445 = scalar_lea.vmem [#allocation11], 7
    %v1446 = vld [vmem:[%s1445] ss:$8 sm:$0xf]
    %v1447 = vld [vmem:[%s1445] ss:$8 sm:$0xf0]
    %v1448 = vor.u32 %v1446, %v1447
    %s1449 = scalar_lea.vmem [#allocation11], 56
    %v1450 = vld [vmem:[%s1449] ss:$8 sm:$0xf]
    %v1451 = vld [vmem:[%s1449] ss:$8 sm:$0xf0]
    %v1452 = vor.u32 %v1450, %v1451
    %v1453 = vrot.slane %v1438, 4
    %v1454 = vadd.f32 %v1438, %v1453
    %v1455 = vrot.slane %v1454, 2
    %v1456 = vadd.f32 %v1454, %v1455
    %v1457 = vrot.slane %v1456, 1
    %v1458 = vadd.f32 %v1456, %v1457
    %v1459 = vrot.slane %v1439, 4
    %v1460 = vadd.f32 %v1439, %v1459
    %v1461 = vrot.slane %v1460, 2
    %v1462 = vadd.f32 %v1460, %v1461
    %v1463 = vrot.slane %v1462, 1
    %v1464 = vadd.f32 %v1462, %v1463
    %v1465 = vrot.slane %v1440, 4
    %v1466 = vadd.f32 %v1440, %v1465
    %v1467 = vrot.slane %v1466, 2
    %v1468 = vadd.f32 %v1466, %v1467
    %v1469 = vrot.slane %v1468, 1
    %v1470 = vadd.f32 %v1468, %v1469
    %v1471 = vrot.slane %v1441, 4
    %v1472 = vadd.f32 %v1441, %v1471
    %v1473 = vrot.slane %v1472, 2
    %v1474 = vadd.f32 %v1472, %v1473
    %v1475 = vrot.slane %v1474, 1
    %v1476 = vadd.f32 %v1474, %v1475
    %v1477 = vrot.slane %v1442, 4
    %v1478 = vadd.f32 %v1442, %v1477
    %v1479 = vrot.slane %v1478, 2
    %v1480 = vadd.f32 %v1478, %v1479
    %v1481 = vrot.slane %v1480, 1
    %v1482 = vadd.f32 %v1480, %v1481
    %v1483 = vrot.slane %v1443, 4
    %v1484 = vadd.f32 %v1443, %v1483
    %v1485 = vrot.slane %v1484, 2
    %v1486 = vadd.f32 %v1484, %v1485
    %v1487 = vrot.slane %v1486, 1
    %v1488 = vadd.f32 %v1486, %v1487
    %v1489 = vrot.slane %v1444, 4
    %v1490 = vadd.f32 %v1444, %v1489
    %v1491 = vrot.slane %v1490, 2
    %v1492 = vadd.f32 %v1490, %v1491
    %v1493 = vrot.slane %v1492, 1
    %v1494 = vadd.f32 %v1492, %v1493
    %v1495 = vmul.f32 %v1458, %v350
    %v1496 = vmul.f32 %v1464, %v350
    %v1497 = vmul.f32 %v1470, %v350
    %v1498 = vmul.f32 %v1476, %v350
    %v1499 = vmul.f32 %v1482, %v350
    %v1500 = vmul.f32 %v1488, %v350
    %v1501 = vmul.f32 %v1494, %v350
    %v1502 = vsub.f32 %v1438, %v1495
    %v1503 = vsub.f32 %v1439, %v1496
    %v1504 = vsub.f32 %v1440, %v1497
    %v1505 = vsub.f32 %v1441, %v1498
    %v1506 = vsub.f32 %v1442, %v1499
    %v1507 = vsub.f32 %v1443, %v1500
    %v1508 = vsub.f32 %v1444, %v1501
    %v1509 = vmul.f32 %v1502, %v1502
    %v1510 = vmul.f32 %v1503, %v1503
    %v1511 = vmul.f32 %v1504, %v1504
    %v1512 = vmul.f32 %v1505, %v1505
    %v1513 = vmul.f32 %v1506, %v1506
    %v1514 = vmul.f32 %v1507, %v1507
    %v1515 = vmul.f32 %v1508, %v1508
    %v1516 = vrot.slane %v1509, 4
    %v1517 = vadd.f32 %v1509, %v1516
    %v1518 = vrot.slane %v1517, 2
    %v1519 = vadd.f32 %v1517, %v1518
    %v1520 = vrot.slane %v1519, 1
    %v1521 = vadd.f32 %v1519, %v1520
    %v1522 = vrot.slane %v1510, 4
    %v1523 = vadd.f32 %v1510, %v1522
    %v1524 = vrot.slane %v1523, 2
    %v1525 = vadd.f32 %v1523, %v1524
    %v1526 = vrot.slane %v1525, 1
    %v1527 = vadd.f32 %v1525, %v1526
    %v1528 = vrot.slane %v1511, 4
    %v1529 = vadd.f32 %v1511, %v1528
    %v1530 = vrot.slane %v1529, 2
    %v1531 = vadd.f32 %v1529, %v1530
    %v1532 = vrot.slane %v1531, 1
    %v1533 = vadd.f32 %v1531, %v1532
    %v1534 = vrot.slane %v1512, 4
    %v1535 = vadd.f32 %v1512, %v1534
    %v1536 = vrot.slane %v1535, 2
    %v1537 = vadd.f32 %v1535, %v1536
    %v1538 = vrot.slane %v1537, 1
    %v1539 = vadd.f32 %v1537, %v1538
    %v1540 = vrot.slane %v1513, 4
    %v1541 = vadd.f32 %v1513, %v1540
    %v1542 = vrot.slane %v1541, 2
    %v1543 = vadd.f32 %v1541, %v1542
    %v1544 = vrot.slane %v1543, 1
    %v1545 = vadd.f32 %v1543, %v1544
    %v1546 = vrot.slane %v1514, 4
    %v1547 = vadd.f32 %v1514, %v1546
    %v1548 = vrot.slane %v1547, 2
    %v1549 = vadd.f32 %v1547, %v1548
    %v1550 = vrot.slane %v1549, 1
    %v1551 = vadd.f32 %v1549, %v1550
    %v1552 = vrot.slane %v1515, 4
    %v1553 = vadd.f32 %v1515, %v1552
    %v1554 = vrot.slane %v1553, 2
    %v1555 = vadd.f32 %v1553, %v1554
    %v1556 = vrot.slane %v1555, 1
    %v1557 = vadd.f32 %v1555, %v1556
    %v1558 = vmul.f32 %v1521, %v350
    %v1559 = vmul.f32 %v1527, %v350
    %v1560 = vmul.f32 %v1533, %v350
    %v1561 = vmul.f32 %v1539, %v350
    %v1562 = vmul.f32 %v1545, %v350
    %v1563 = vmul.f32 %v1551, %v350
    %v1564 = vmul.f32 %v1557, %v350
    %v1565 = vadd.f32 %v1558, 1e-05
    %v1566 = vadd.f32 %v1559, 1e-05
    %v1567 = vadd.f32 %v1560, 1e-05
    %v1568 = vadd.f32 %v1561, 1e-05
    %v1569 = vadd.f32 %v1562, 1e-05
    %v1570 = vadd.f32 %v1563, 1e-05
    %v1571 = vadd.f32 %v1564, 1e-05
    %v1572 = vrsqrt.pop %v1565
    %v1573 = vrsqrt.pop %v1566
    %v1574 = vrsqrt.pop %v1567
    %v1575 = vrsqrt.pop %v1568
    %v1576 = vrsqrt.pop %v1569
    %v1577 = vrsqrt.pop %v1570
    %v1578 = vrsqrt.pop %v1571
    %v1586 = vcombine.low %v1572, %v1573
    %v1587 = vcombine.low %v1574, %v1575
    %v1588 = vcombine.low %v1576, %v1577
    %v1590 = vunpack.c.l.s4 1966171168
    %v1591 = vunpack.c.0.s8 %v1590
    %v1592 = vlaneseq
    %v1593 = vshrl.u32 %v1592, 7
    %v1594 = vsub.s32 %v1591, %v1593
    %v1595 = vrot.slane %v1586, %v1594
    %v1597 = vunpack.c.l.s4 1966171168
    %v1598 = vunpack.c.0.s8 %v1597
    %v1599 = vlaneseq
    %v1600 = vshrl.u32 %v1599, 7
    %v1601 = vsub.s32 %v1598, %v1600
    %v1602 = vrot.slane %v1587, %v1601
    %v1604 = vunpack.c.l.s4 1966171168
    %v1605 = vunpack.c.0.s8 %v1604
    %v1606 = vlaneseq
    %v1607 = vshrl.u32 %v1606, 7
    %v1608 = vsub.s32 %v1605, %v1607
    %v1609 = vrot.slane %v1588, %v1608
    %v1611 = vunpack.c.l.s4 1966171168
    %v1612 = vunpack.c.0.s8 %v1611
    %v1613 = vlaneseq
    %v1614 = vshrl.u32 %v1613, 7
    %v1615 = vsub.s32 %v1612, %v1614
    %v1616 = vrot.slane %v1578, %v1615
    %v1617 = vcombine.low %v1595, %v1602
    %v1618 = vcombine.low %v1609, %v1616
    %v1620 = vunpack.c.l.s4 1966171168
    %v1621 = vunpack.c.0.s8 %v1620
    %v1622 = vlaneseq
    %v1623 = vshrl.u32 %v1622, 7
    %v1624 = vsub.s32 %v1621, %v1623
    %v1625 = vrot.slane %v1617, %v1624
    %v1627 = vunpack.c.l.s4 1966171168
    %v1628 = vunpack.c.0.s8 %v1627
    %v1629 = vlaneseq
    %v1630 = vshrl.u32 %v1629, 7
    %v1631 = vsub.s32 %v1628, %v1630
    %v1632 = vrot.slane %v1618, %v1631
    %v1633 = vcombine.low %v1625, %v1632
    %v1635 = vmul.f32 %v1448, %v1633
    %v1637 = vlaneseq
    %v1638 = vshrl.u32 %v1637, 7
    %v1639 = vsub.s32 0, %v1638
    %v1640 = vrot.slane %v1635, %v1639
    %v1641 = vlaneseq
    %v1642 = vshrl.u32 %v1641, 7
    %v1643 = vsub.s32 1, %v1642
    %v1644 = vrot.slane %v1635, %v1643
    %v1645 = vlaneseq
    %v1646 = vshrl.u32 %v1645, 7
    %v1647 = vsub.s32 2, %v1646
    %v1648 = vrot.slane %v1635, %v1647
    %v1649 = vlaneseq
    %v1650 = vshrl.u32 %v1649, 7
    %v1651 = vsub.s32 3, %v1650
    %v1652 = vrot.slane %v1635, %v1651
    %v1653 = vlaneseq
    %v1654 = vshrl.u32 %v1653, 7
    %v1655 = vsub.s32 4, %v1654
    %v1656 = vrot.slane %v1635, %v1655
    %v1657 = vlaneseq
    %v1658 = vshrl.u32 %v1657, 7
    %v1659 = vsub.s32 5, %v1658
    %v1660 = vrot.slane %v1635, %v1659
    %v1661 = vlaneseq
    %v1662 = vshrl.u32 %v1661, 7
    %v1663 = vsub.s32 6, %v1662
    %v1664 = vrot.slane %v1635, %v1663
    %v1672 = vmul.f32 %v1495, %v1640
    %v1673 = vmul.f32 %v1496, %v1644
    %v1674 = vmul.f32 %v1497, %v1648
    %v1675 = vmul.f32 %v1498, %v1652
    %v1676 = vmul.f32 %v1499, %v1656
    %v1677 = vmul.f32 %v1500, %v1660
    %v1678 = vmul.f32 %v1501, %v1664
    %v1686 = vcombine.low %v1672, %v1673
    %v1687 = vcombine.low %v1674, %v1675
    %v1688 = vcombine.low %v1676, %v1677
    %v1690 = vunpack.c.l.s4 1966171168
    %v1691 = vunpack.c.0.s8 %v1690
    %v1692 = vlaneseq
    %v1693 = vshrl.u32 %v1692, 7
    %v1694 = vsub.s32 %v1691, %v1693
    %v1695 = vrot.slane %v1686, %v1694
    %v1697 = vunpack.c.l.s4 1966171168
    %v1698 = vunpack.c.0.s8 %v1697
    %v1699 = vlaneseq
    %v1700 = vshrl.u32 %v1699, 7
    %v1701 = vsub.s32 %v1698, %v1700
    %v1702 = vrot.slane %v1687, %v1701
    %v1704 = vunpack.c.l.s4 1966171168
    %v1705 = vunpack.c.0.s8 %v1704
    %v1706 = vlaneseq
    %v1707 = vshrl.u32 %v1706, 7
    %v1708 = vsub.s32 %v1705, %v1707
    %v1709 = vrot.slane %v1688, %v1708
    %v1711 = vunpack.c.l.s4 1966171168
    %v1712 = vunpack.c.0.s8 %v1711
    %v1713 = vlaneseq
    %v1714 = vshrl.u32 %v1713, 7
    %v1715 = vsub.s32 %v1712, %v1714
    %v1716 = vrot.slane %v1678, %v1715
    %v1717 = vcombine.low %v1695, %v1702
    %v1718 = vcombine.low %v1709, %v1716
    %v1720 = vunpack.c.l.s4 1966171168
    %v1721 = vunpack.c.0.s8 %v1720
    %v1722 = vlaneseq
    %v1723 = vshrl.u32 %v1722, 7
    %v1724 = vsub.s32 %v1721, %v1723
    %v1725 = vrot.slane %v1717, %v1724
    %v1727 = vunpack.c.l.s4 1966171168
    %v1728 = vunpack.c.0.s8 %v1727
    %v1729 = vlaneseq
    %v1730 = vshrl.u32 %v1729, 7
    %v1731 = vsub.s32 %v1728, %v1730
    %v1732 = vrot.slane %v1718, %v1731
    %v1733 = vcombine.low %v1725, %v1732
    %v1735 = vsub.f32 %v1452, %v1733
    %v1736 = vmul.f32 %v1438, %v1640
    %v1737 = vmul.f32 %v1439, %v1644
    %v1738 = vmul.f32 %v1440, %v1648
    %v1739 = vmul.f32 %v1441, %v1652
    %v1740 = vmul.f32 %v1442, %v1656
    %v1741 = vmul.f32 %v1443, %v1660
    %v1742 = vmul.f32 %v1444, %v1664
    %v1744 = vlaneseq
    %v1745 = vshrl.u32 %v1744, 7
    %v1746 = vsub.s32 0, %v1745
    %v1747 = vrot.slane %v1735, %v1746
    %v1748 = vlaneseq
    %v1749 = vshrl.u32 %v1748, 7
    %v1750 = vsub.s32 1, %v1749
    %v1751 = vrot.slane %v1735, %v1750
    %v1752 = vlaneseq
    %v1753 = vshrl.u32 %v1752, 7
    %v1754 = vsub.s32 2, %v1753
    %v1755 = vrot.slane %v1735, %v1754
    %v1756 = vlaneseq
    %v1757 = vshrl.u32 %v1756, 7
    %v1758 = vsub.s32 3, %v1757
    %v1759 = vrot.slane %v1735, %v1758
    %v1760 = vlaneseq
    %v1761 = vshrl.u32 %v1760, 7
    %v1762 = vsub.s32 4, %v1761
    %v1763 = vrot.slane %v1735, %v1762
    %v1764 = vlaneseq
    %v1765 = vshrl.u32 %v1764, 7
    %v1766 = vsub.s32 5, %v1765
    %v1767 = vrot.slane %v1735, %v1766
    %v1768 = vlaneseq
    %v1769 = vshrl.u32 %v1768, 7
    %v1770 = vsub.s32 6, %v1769
    %v1771 = vrot.slane %v1735, %v1770
    %v1779 = vadd.f32 %v1736, %v1747
    %v1780 = vadd.f32 %v1737, %v1751
    %v1781 = vadd.f32 %v1738, %v1755
    %v1782 = vadd.f32 %v1739, %v1759
    %v1783 = vadd.f32 %v1740, %v1763
    %v1784 = vadd.f32 %v1741, %v1767
    %v1785 = vadd.f32 %v1742, %v1771
    %s1786 = smul.u32 4, 112
    %s1787 = smul.u32 %s1786, 1
    %s1788 = sshll.u32 %s1787, 4
    %1789 = dma.done %s165, %s1788
    %v1790 = vpack.c.bf16 %v1779, %v1779
    %v1791 = vpack.c.bf16 %v1780, %v1780
    %v1792 = vpack.c.bf16 %v1781, %v1781
    %v1793 = vpack.c.bf16 %v1782, %v1782
    %v1794 = vpack.c.bf16 %v1783, %v1783
    %v1795 = vpack.c.bf16 %v1784, %v1784
    %v1796 = vpack.c.bf16 %v1785, %v1785
    %v1797 = vld [vmem:[#allocation4] sm:$0xff]
    %v1798 = vld [vmem:[#allocation4 + $0x8] sm:$0xff]
    %v1799 = vld [vmem:[#allocation4 + $0x10] sm:$0xff]
    %v1800 = vld [vmem:[#allocation4 + $0x18] sm:$0xff]
    %v1801 = vld [vmem:[#allocation4 + $0x20] sm:$0xff]
    %v1802 = vld [vmem:[#allocation4 + $0x28] sm:$0xff]
    %v1803 = vld [vmem:[#allocation4 + $0x30] sm:$0xff]
    %v1804 = vld [vmem:[#allocation4 + $0x38] sm:$0xff]
    %v1805 = vld [vmem:[#allocation4 + $0x40] sm:$0xff]
    %v1806 = vld [vmem:[#allocation4 + $0x48] sm:$0xff]
    %v1807 = vld [vmem:[#allocation4 + $0x50] sm:$0xff]
    %v1808 = vld [vmem:[#allocation4 + $0x58] sm:$0xff]
    %v1809 = vld [vmem:[#allocation4 + $0x60] sm:$0xff]
    %v1810 = vld [vmem:[#allocation4 + $0x68] sm:$0xff]
    %v1811 = vld [vmem:[#allocation4 + $0x70] sm:$0xff]
    %v1812 = vld [vmem:[#allocation4 + $0x78] sm:$0xff]
    %v1813 = vld [vmem:[#allocation4 + $0x80] sm:$0xff]
    %v1814 = vld [vmem:[#allocation4 + $0x88] sm:$0xff]
    %v1815 = vld [vmem:[#allocation4 + $0x90] sm:$0xff]
    %v1816 = vld [vmem:[#allocation4 + $0x98] sm:$0xff]
    %v1817 = vld [vmem:[#allocation4 + $0xa0] sm:$0xff]
    %v1818 = vld [vmem:[#allocation4 + $0xa8] sm:$0xff]
    %v1819 = vld [vmem:[#allocation4 + $0xb0] sm:$0xff]
    %v1820 = vld [vmem:[#allocation4 + $0xb8] sm:$0xff]
    %v1821 = vld [vmem:[#allocation4 + $0xc0] sm:$0xff]
    %v1822 = vld [vmem:[#allocation4 + $0xc8] sm:$0xff]
    %v1823 = vld [vmem:[#allocation4 + $0xd0] sm:$0xff]
    %v1824 = vld [vmem:[#allocation4 + $0xd8] sm:$0xff]
    %v1825 = vld [vmem:[#allocation4 + $0xe0] sm:$0xff]
    %v1826 = vld [vmem:[#allocation4 + $0xe8] sm:$0xff]
    %v1827 = vld [vmem:[#allocation4 + $0xf0] sm:$0xff]
    %v1828 = vld [vmem:[#allocation4 + $0xf8] sm:$0xff]
    %v1829 = vld [vmem:[#allocation4 + $0x100] sm:$0xff]
    %v1830 = vld [vmem:[#allocation4 + $0x108] sm:$0xff]
    %v1831 = vld [vmem:[#allocation4 + $0x110] sm:$0xff]
    %v1832 = vld [vmem:[#allocation4 + $0x118] sm:$0xff]
    %v1833 = vld [vmem:[#allocation4 + $0x120] sm:$0xff]
    %v1834 = vld [vmem:[#allocation4 + $0x128] sm:$0xff]
    %v1835 = vld [vmem:[#allocation4 + $0x130] sm:$0xff]
    %v1836 = vld [vmem:[#allocation4 + $0x138] sm:$0xff]
    %v1837 = vld [vmem:[#allocation4 + $0x140] sm:$0xff]
    %v1838 = vld [vmem:[#allocation4 + $0x148] sm:$0xff]
    %v1839 = vld [vmem:[#allocation4 + $0x150] sm:$0xff]
    %v1840 = vld [vmem:[#allocation4 + $0x158] sm:$0xff]
    %v1841 = vld [vmem:[#allocation4 + $0x160] sm:$0xff]
    %v1842 = vld [vmem:[#allocation4 + $0x168] sm:$0xff]
    %v1843 = vld [vmem:[#allocation4 + $0x170] sm:$0xff]
    %v1844 = vld [vmem:[#allocation4 + $0x178] sm:$0xff]
    %v1845 = vld [vmem:[#allocation4 + $0x180] sm:$0xff]
    %v1846 = vld [vmem:[#allocation4 + $0x188] sm:$0xff]
    %v1847 = vld [vmem:[#allocation4 + $0x190] sm:$0xff]
    %v1848 = vld [vmem:[#allocation4 + $0x198] sm:$0xff]
    %v1849 = vld [vmem:[#allocation4 + $0x1a0] sm:$0xff]
    %v1850 = vld [vmem:[#allocation4 + $0x1a8] sm:$0xff]
    %v1851 = vld [vmem:[#allocation4 + $0x1b0] sm:$0xff]
    %v1852 = vld [vmem:[#allocation4 + $0x1b8] sm:$0xff]
    %v1853 = vld [vmem:[#allocation11 + $0x39] ss:$0 sm:$0xff]
    %1854 = vmatprep.subr.bf16.mxu0 0
    %1855 = vmatpush1.bf16.msra.mxu0 %v1797
    %1856 = vmatprep.subr.bf16.mxu0 0
    %1857 = vmatpush1.bf16.msra.mxu0 %v1798
    %1858 = vmatprep.subr.bf16.mxu0 0
    %1859 = vmatpush1.bf16.msra.mxu0 %v1799
    %1860 = vmatprep.subr.bf16.mxu0 0
    %1861 = vmatpush1.bf16.msra.mxu0 %v1800
    %1862 = vmatprep.subr.bf16.mxu0 0
    %1863 = vmatpush1.bf16.msra.mxu0 %v1801
    %1864 = vmatprep.subr.bf16.mxu0 0
    %1865 = vmatpush1.bf16.msra.mxu0 %v1802
    %1866 = vmatprep.subr.bf16.mxu0 0
    %1867 = vmatpush1.bf16.msra.mxu0 %v1803
    %1868 = vmatprep.subr.bf16.mxu0 0
    %1869 = vmatpush1.bf16.msra.mxu0 %v1804
    %1870 = vmatprep.subr.bf16.mxu0 0
    %1871 = vmatpush1.bf16.msra.mxu0 %v1805
    %1872 = vmatprep.subr.bf16.mxu0 0
    %1873 = vmatpush1.bf16.msra.mxu0 %v1806
    %1874 = vmatprep.subr.bf16.mxu0 0
    %1875 = vmatpush1.bf16.msra.mxu0 %v1807
    %1876 = vmatprep.subr.bf16.mxu0 0
    %1877 = vmatpush1.bf16.msra.mxu0 %v1808
    %1878 = vmatprep.subr.bf16.mxu0 0
    %1879 = vmatpush1.bf16.msra.mxu0 %v1809
    %1880 = vmatprep.subr.bf16.mxu0 0
    %1881 = vmatpush1.bf16.msra.mxu0 %v1810
    %1882 = vmatprep.subr.bf16.mxu0 0
    %1883 = vmatpush1.bf16.msra.mxu0 %v1811
    %1884 = vmatprep.subr.bf16.mxu0 0
    %1885 = vmatpush1.bf16.msra.mxu0 %v1812
    %1886 = vmatprep.mubr.bf16.mxu0 %v1791
    %1887 = vmatmul.mubr.bf16.gmra.mrb[0].mxu0 %v1790
    %v1888 = vpop.f32.mrb[0].mxu0
    %v1889 = vadd.f32 %v1853, %v1888
    %v1890 = vpop.f32.mrb[0].mxu0
    %v1891 = vpop.f32.mrb[0].mxu0
    %v1892 = vpop.f32.mrb[0].mxu0
    %1893 = vdwg.mxu0
    %1894 = vmatprep.subr.bf16.mxu0 0
    %1895 = vmatpush1.bf16.msra.mxu0 %v1813
    %1896 = vmatprep.subr.bf16.mxu0 0
    %1897 = vmatpush1.bf16.msra.mxu0 %v1814
    %1898 = vmatprep.subr.bf16.mxu0 0
    %1899 = vmatpush1.bf16.msra.mxu0 %v1815
    %1900 = vmatprep.subr.bf16.mxu0 0
    %1901 = vmatpush1.bf16.msra.mxu0 %v1816
    %1902 = vmatprep.subr.bf16.mxu0 0
    %1903 = vmatpush1.bf16.msra.mxu0 %v1817
    %1904 = vmatprep.subr.bf16.mxu0 0
    %1905 = vmatpush1.bf16.msra.mxu0 %v1818
    %1906 = vmatprep.subr.bf16.mxu0 0
    %1907 = vmatpush1.bf16.msra.mxu0 %v1819
    %1908 = vmatprep.subr.bf16.mxu0 0
    %1909 = vmatpush1.bf16.msra.mxu0 %v1820
    %1910 = vmatprep.subr.bf16.mxu0 0
    %1911 = vmatpush1.bf16.msra.mxu0 %v1821
    %1912 = vmatprep.subr.bf16.mxu0 0
    %1913 = vmatpush1.bf16.msra.mxu0 %v1822
    %1914 = vmatprep.subr.bf16.mxu0 0
    %1915 = vmatpush1.bf16.msra.mxu0 %v1823
    %1916 = vmatprep.subr.bf16.mxu0 0
    %1917 = vmatpush1.bf16.msra.mxu0 %v1824
    %1918 = vmatprep.subr.bf16.mxu0 0
    %1919 = vmatpush1.bf16.msra.mxu0 %v1825
    %1920 = vmatprep.subr.bf16.mxu0 0
    %1921 = vmatpush1.bf16.msra.mxu0 %v1826
    %1922 = vmatprep.subr.bf16.mxu0 0
    %1923 = vmatpush1.bf16.msra.mxu0 %v1827
    %1924 = vmatprep.subr.bf16.mxu0 0
    %1925 = vmatpush1.bf16.msra.mxu0 %v1828
    %1926 = vmatprep.mubr.bf16.mxu0 %v1793
    %1927 = vmatmul.mubr.bf16.gmra.mrb[0].mxu0 %v1792
    %v1928 = vpop.f32.mrb[0].mxu0
    %v1929 = vadd.f32 %v1889, %v1928
    %v1930 = vpop.f32.mrb[0].mxu0
    %v1931 = vpop.f32.mrb[0].mxu0
    %v1932 = vpop.f32.mrb[0].mxu0
    %1933 = vdwg.mxu0
    %1934 = vmatprep.subr.bf16.mxu0 0
    %1935 = vmatpush1.bf16.msra.mxu0 %v1829
    %1936 = vmatprep.subr.bf16.mxu0 0
    %1937 = vmatpush1.bf16.msra.mxu0 %v1830
    %1938 = vmatprep.subr.bf16.mxu0 0
    %1939 = vmatpush1.bf16.msra.mxu0 %v1831
    %1940 = vmatprep.subr.bf16.mxu0 0
    %1941 = vmatpush1.bf16.msra.mxu0 %v1832
    %1942 = vmatprep.subr.bf16.mxu0 0
    %1943 = vmatpush1.bf16.msra.mxu0 %v1833
    %1944 = vmatprep.subr.bf16.mxu0 0
    %1945 = vmatpush1.bf16.msra.mxu0 %v1834
    %1946 = vmatprep.subr.bf16.mxu0 0
    %1947 = vmatpush1.bf16.msra.mxu0 %v1835
    %1948 = vmatprep.subr.bf16.mxu0 0
    %1949 = vmatpush1.bf16.msra.mxu0 %v1836
    %1950 = vmatprep.subr.bf16.mxu0 0
    %1951 = vmatpush1.bf16.msra.mxu0 %v1837
    %1952 = vmatprep.subr.bf16.mxu0 0
    %1953 = vmatpush1.bf16.msra.mxu0 %v1838
    %1954 = vmatprep.subr.bf16.mxu0 0
    %1955 = vmatpush1.bf16.msra.mxu0 %v1839
    %1956 = vmatprep.subr.bf16.mxu0 0
    %1957 = vmatpush1.bf16.msra.mxu0 %v1840
    %1958 = vmatprep.subr.bf16.mxu0 0
    %1959 = vmatpush1.bf16.msra.mxu0 %v1841
    %1960 = vmatprep.subr.bf16.mxu0 0
    %1961 = vmatpush1.bf16.msra.mxu0 %v1842
    %1962 = vmatprep.subr.bf16.mxu0 0
    %1963 = vmatpush1.bf16.msra.mxu0 %v1843
    %1964 = vmatprep.subr.bf16.mxu0 0
    %1965 = vmatpush1.bf16.msra.mxu0 %v1844
    %1966 = vmatprep.mubr.bf16.mxu0 %v1795
    %1967 = vmatmul.mubr.bf16.gmra.mrb[0].mxu0 %v1794
    %v1968 = vpop.f32.mrb[0].mxu0
    %v1969 = vadd.f32 %v1929, %v1968
    %v1970 = vpop.f32.mrb[0].mxu0
    %v1971 = vpop.f32.mrb[0].mxu0
    %v1972 = vpop.f32.mrb[0].mxu0
    %1973 = vdwg.mxu0
    %1974 = vmatprep.subr.bf16.mxu0 0
    %1975 = vmatpush1.bf16.msra.mxu0 %v1845
    %1976 = vmatprep.subr.bf16.mxu0 0
    %1977 = vmatpush1.bf16.msra.mxu0 %v1846
    %1978 = vmatprep.subr.bf16.mxu0 0
    %1979 = vmatpush1.bf16.msra.mxu0 %v1847
    %1980 = vmatprep.subr.bf16.mxu0 0
    %1981 = vmatpush1.bf16.msra.mxu0 %v1848
    %1982 = vmatprep.subr.bf16.mxu0 0
    %1983 = vmatpush1.bf16.msra.mxu0 %v1849
    %1984 = vmatprep.subr.bf16.mxu0 0
    %1985 = vmatpush1.bf16.msra.mxu0 %v1850
    %1986 = vmatprep.subr.bf16.mxu0 0
    %1987 = vmatpush1.bf16.msra.mxu0 %v1851
    %1988 = vmatprep.subr.bf16.mxu0 0
    %1989 = vmatpush1.bf16.msra.mxu0 %v1852
    %1990 = vmatprep.subr.bf16.mxu0 0
    %1991 = vmatpush1.bf16.msra.mxu0 0
    %1992 = vmatprep.subr.bf16.mxu0 0
    %1993 = vmatpush1.bf16.msra.mxu0 0
    %1994 = vmatprep.subr.bf16.mxu0 0
    %1995 = vmatpush1.bf16.msra.mxu0 0
    %1996 = vmatprep.subr.bf16.mxu0 0
    %1997 = vmatpush1.bf16.msra.mxu0 0
    %1998 = vmatprep.subr.bf16.mxu0 0
    %1999 = vmatpush1.bf16.msra.mxu0 0
    %2000 = vmatprep.subr.bf16.mxu0 0
    %2001 = vmatpush1.bf16.msra.mxu0 0
    %2002 = vmatprep.subr.bf16.mxu0 0
    %2003 = vmatpush1.bf16.msra.mxu0 0
    %2004 = vmatprep.subr.bf16.mxu0 0
    %2005 = vmatpush1.bf16.msra.mxu0 0
    %2006 = vmatprep.mubr.bf16.mxu0 0
    %2007 = vmatmul.mubr.bf16.gmra.mrb[0].mxu0 %v1796
    %v2008 = vpop.f32.mrb[0].mxu0
    %v2009 = vadd.f32 %v1969, %v2008
    %v2010 = vpop.f32.mrb[0].mxu0
    %v2011 = vpop.f32.mrb[0].mxu0
    %v2012 = vpop.f32.mrb[0].mxu0
    %2013 = vdwg.mxu0
    %2014 = vst [vmem:[#allocation12] sm:$0xff] %v2009
    // Predicated region
    $region30: #{tpu_custom_call.1} parent=1 // pred_check
      _
    $region31: #{tpu_custom_call.1} parent=1 // pred_check_branch
      %2016 = sbr.rel (0) target = $region33
    $region32: #{tpu_custom_call.1} parent=1 // pred_region
      %s2018 = ssub.s32 128, 128
      %2019 = vsyncadd [#allocation8], %s2018
      %s2021 = sshll.u32 [#allocation12], 4
      %s2022 = int_to_ptr.vmem [resolvable:$true] %s2021
      %2024 = dma.vmem_to_hbm [thread:$0]  %s2022, 128, %s6, [#allocation8]
    $region33: #{tpu_custom_call.1} parent=1 // pred_fallthru
      _
    // Predicated region
    $region34: #{tpu_custom_call.1} parent=1 // pred_check
      _
    $region35: #{tpu_custom_call.1} parent=1 // pred_check_branch
      %2026 = sbr.rel (0) target = $region37
    $region36: #{tpu_custom_call.1} parent=1 // pred_region
      %2027 = dma.done [#allocation8], 128
    $region37: #{tpu_custom_call.1} parent=1 // pred_fallthru
      _
    %2028 = vsyncpa [#allocation7], 1
    %2029 = vsyncpa [#allocation10], 1
    %2030 = vsyncpa [#allocation8], 1
  %2031 = vsyncmov [#allocation5]
  %s2032 = vpop.sfrf %2031
  %p2033 = scmp.eq.s32.totalorder %s2032, 0
  %p2034 = pneg %p2033
  %2036 = shalt.err (%p2034)
  %s2037 = scalar_lea.sflag [#allocation5], 1
  %2038 = vsyncmov %s2037
  %s2039 = vpop.sfrf %2038
  %p2040 = scmp.eq.s32.totalorder %s2039, 0
  %p2041 = pneg %p2040
  %2043 = shalt.err (%p2041)
  %s2044 = scalar_lea.sflag [#allocation5], 2
  %2045 = vsyncmov %s2044
  %s2046 = vpop.sfrf %2045
  %p2047 = scmp.eq.s32.totalorder %s2046, 0
  %p2048 = pneg %p2047
  %2050 = shalt.err (%p2048)
  %s2051 = scalar_lea.sflag [#allocation5], 3
  %2052 = vsyncmov %s2051
  %s2053 = vpop.sfrf %2052
  %p2054 = scmp.eq.s32.totalorder %s2053, 0
  %p2055 = pneg %p2054
  %2057 = shalt.err (%p2055)

</llo_original>
